<compile_context>
chip_gen: v5e
topology: v5e:2x2
jax: 0.10.0
libtpu: 0.0.40
codegen_flags: <defaults>
</compile_context>

<pallas_src>
import functools

import jax
import jax.numpy as jnp
from jax.experimental import pallas as pl
from jax.experimental.pallas import tpu as pltpu


def _round_up(x, m):
    return (x + m - 1) // m * m


# ----------------------------------------------------------------------------
# Pallas kernel 1: fused (bf16 matmul -> per-column scale/bias -> activation)
# ----------------------------------------------------------------------------
def _fused_matmul_kernel(a_ref, w_ref, scale_ref, bias_ref, o_ref, acc_ref, *, act):
    @pl.when(pl.program_id(2) == 0)
    def _():
        acc_ref[...] = jnp.zeros_like(acc_ref)

    acc_ref[...] += jnp.dot(a_ref[...], w_ref[...],
                            preferred_element_type=jnp.float32)

    @pl.when(pl.program_id(2) == pl.num_programs(2) - 1)
    def _():
        y = acc_ref[...] * scale_ref[...] + bias_ref[...]
        if act == "relu":
            y = jnp.maximum(y, 0.0)
        elif act == "sigmoid":
            y = jax.nn.sigmoid(y)
        o_ref[...] = y.astype(o_ref.dtype)


def fused_matmul(a, p, act, out_dtype=jnp.bfloat16):
    """act( (a @ W) * scale + bias ); W/scale/bias come pre-padded (bf16/f32)."""
    M, K = a.shape
    K_pad, N_pad = p["w"].shape
    N = p["N"]
    assert K == p["K"]

    # Tile selection: big tiles (per-grid-step overhead dominates tiny ones),
    # keep >=2 blocks on a parallel axis where feasible (v7x megacore), and
    # stay far below even v5e's 16 MiB default scoped VMEM.
    tk = K_pad if K_pad <= 512 else 512
    tn = N_pad if N_pad <= 512 else 512
    M16 = _round_up(M, 16)                      # bf16 sublane packing
    if M16 <= 256:
        M_pad, tm = M16, M16
    else:
        M_pad, tm = _round_up(M, 256), 256

    a_p = jnp.pad(a.astype(jnp.bfloat16), ((0, M_pad - M), (0, K_pad - K)))

    grid = (M_pad // tm, N_pad // tn, K_pad // tk)

    # NOTE: for the skinny-M bottleneck layers this kernel is weight-streaming;
    # bf16 weights already halve that traffic.  (Optionally pl.Buffered(3) on
    # the W BlockSpec deepens the DMA pipeline further.)
    out = pl.pallas_call(
        functools.partial(_fused_matmul_kernel, act=act),
        out_shape=jax.ShapeDtypeStruct((M_pad, N_pad), out_dtype),
        grid_spec=pltpu.PrefetchScalarGridSpec(
            num_scalar_prefetch=0,
            grid=grid,
            in_specs=[
                pl.BlockSpec((tm, tk), lambda i, j, k: (i, k)),
                pl.BlockSpec((tk, tn), lambda i, j, k: (k, j)),
                pl.BlockSpec((1, tn), lambda i, j, k: (0, j)),
                pl.BlockSpec((1, tn), lambda i, j, k: (0, j)),
            ],
            out_specs=pl.BlockSpec((tm, tn), lambda i, j, k: (i, j)),
            scratch_shapes=[pltpu.VMEM((tm, tn), jnp.float32)],
        ),
        compiler_params=pltpu.CompilerParams(
            dimension_semantics=("parallel", "parallel", "arbitrary"),
            vmem_limit_bytes=32 * 1024 * 1024),
    )(a_p, p["w"], p["scale"], p["bias"])
    return out[:M, :N]


# ----------------------------------------------------------------------------
# Pallas kernel 2: per-plane 3x3 VPU stencil (Cin=Cout=1) + folded BN + ReLU.
# The B*C planes live on the lane axis; taps & bias are scalars in SMEM.
# ----------------------------------------------------------------------------
def _stencil_kernel(tap_ref, x_ref, o_ref):
    H, W = o_ref.shape[0], o_ref.shape[1]
    acc = jnp.zeros(o_ref.shape, jnp.float32)
    for dh in range(3):
        for dw in range(3):
            acc = acc + tap_ref[3 * dh + dw] * x_ref[dh:dh + H, dw:dw + W, :, :]
    o_ref[...] = jnp.maximum(acc + tap_ref[9], 0.0)


def per_plane_conv3x3_sum(x_bhwc, taps):
    """Apply the same (3x3 conv 1->1 + BN + ReLU) to every (b, c) plane of
    x_bhwc independently, then sum over channels.  Returns (B, H, W) f32."""
    B, H, W, C = x_bhwc.shape
    L = B * C
    Lp = _round_up(L, 128)
    x = jnp.transpose(x_bhwc, (1, 2, 0, 3)).reshape(H, W, L).astype(jnp.float32)
    if Lp != L:
        x = jnp.pad(x, ((0, 0), (0, 0), (0, Lp - L)))
    x = x.reshape(H, W, Lp // 128, 128)
    x = jnp.pad(x, ((1, 1), (1, 1), (0, 0), (0, 0)))   # spatial halo (zeros)

    y = pl.pallas_call(
        _stencil_kernel,
        out_shape=jax.ShapeDtypeStruct((H, W, Lp // 128, 128), jnp.float32),
        in_specs=[pl.BlockSpec(memory_space=pltpu.MemorySpace.SMEM),
                  pl.BlockSpec(memory_space=pltpu.MemorySpace.VMEM)],
        out_specs=pl.BlockSpec(memory_space=pltpu.MemorySpace.VMEM),
    )(taps, x)

    y = y.reshape(H, W, Lp)[:, :, :L].reshape(H, W, B, C)
    return jnp.transpose(jnp.sum(y, axis=3), (2, 0, 1))          # (B, H, W)


# ----------------------------------------------------------------------------
# Layer helpers (NHWC) — im2col glue + fused Pallas matmul
# ----------------------------------------------------------------------------
def conv3x3_fused(x, p, act="relu", out_dtype=jnp.bfloat16):
    """3x3 conv (padding=1) + folded BatchNorm + activation.  x: (N,H,W,Cin)."""
    N, H, W, Cin = x.shape
    Cout = p["N"]
    xb = x.astype(jnp.bfloat16)
    xp = jnp.pad(xb, ((0, 0), (1, 1), (1, 1), (0, 0)))
    # TODO(synk): fold the 3x3 im2col into the matmul kernel (tap axis on the K
    # grid dim with shifted index_maps) to avoid materializing a 9x activation
    # copy in HBM for the big decoder layers.
    cols = [xp[:, dh:dh + H, dw:dw + W, :] for dh in range(3) for dw in range(3)]
    a = jnp.concatenate(cols, axis=-1).reshape(N * H * W, 9 * Cin)
    out = fused_matmul(a, p, act=act, out_dtype=out_dtype)
    return out.reshape(N, H, W, Cout)


def conv1x1_fused(x, p, act, out_dtype=jnp.bfloat16):
    N, H, W, Cin = x.shape
    Cout = p["N"]
    a = x.reshape(N * H * W, Cin)
    out = fused_matmul(a, p, act=act, out_dtype=out_dtype)
    return out.reshape(N, H, W, Cout)


def double_conv_apply(x, plist):
    x = conv3x3_fused(x, plist[0], act="relu")
    x = conv3x3_fused(x, plist[1], act="relu")
    return x


def maxpool2(x):  # 2x2, stride 2
    N, H, W, C = x.shape
    return x.reshape(N, H // 2, 2, W // 2, 2, C).max(axis=(2, 4))


def upsample_bilinear_2x(x):  # scale_factor=2, mode='bilinear', align_corners=True
    dtype = x.dtype

    def interp(arr, axis, size_in):
        size_out = 2 * size_in
        c = jnp.arange(size_out, dtype=jnp.float32) * (size_in - 1) / (size_out - 1)
        i0 = jnp.floor(c).astype(jnp.int32)
        i1 = jnp.minimum(i0 + 1, size_in - 1)
        t = c - i0.astype(jnp.float32)
        a0 = jnp.take(arr, i0, axis=axis)
        a1 = jnp.take(arr, i1, axis=axis)
        shape = [1] * arr.ndim
        shape[axis] = size_out
        t = t.reshape(shape)
        return a0 * (1.0 - t) + a1 * t

    N, H, W, C = x.shape
    y = interp(x.astype(jnp.float32), 1, H)
    y = interp(y, 2, W)
    return y.astype(dtype)


# ----------------------------------------------------------------------------
# Deterministic parameter init (shapes from UNet.__init__); BN folded into
# per-output-channel (scale, bias); weights prepared (padded/reshaped/bf16)
# once, offline.
# ----------------------------------------------------------------------------
def conv_params(key, kh, kw, cin, cout, with_bn):
    k1, k2, k3, k4, k5, k6 = jax.random.split(key, 6)
    fan_in = kh * kw * cin
    w = jax.random.normal(k1, (kh, kw, cin, cout), jnp.float32) * (2.0 / fan_in) ** 0.5
    b = jax.random.normal(k2, (cout,), jnp.float32) * 0.01
    if with_bn:
        gamma = 1.0 + 0.1 * jax.random.normal(k3, (cout,), jnp.float32)
        beta = 0.1 * jax.random.normal(k4, (cout,), jnp.float32)
        mean = 0.1 * jax.random.normal(k5, (cout,), jnp.float32)
        var = 1.0 + 0.1 * jax.random.uniform(k6, (cout,), jnp.float32)
        scale = gamma / jnp.sqrt(var + 1e-5)
        bias = (b - mean) * scale + beta
    else:
        scale = jnp.ones((cout,), jnp.float32)
        bias = b
    return {"w": w, "scale": scale, "bias": bias}


def prepare_conv(raw, kh, kw, cin, cout):
    """Pad / reshape / cast the weight to its MXU-ready form (done once)."""
    K, N = kh * kw * cin, cout
    K_pad = _round_up(K, 128) if K <= 512 else _round_up(K, 512)
    N_pad = _round_up(N, 128) if N <= 512 else _round_up(N, 512)
    w_p = jnp.pad(raw["w"].reshape(K, N),          # (dh, dw, cin) row ordering
                  ((0, K_pad - K), (0, N_pad - N))).astype(jnp.bfloat16)
    scale_p = jnp.pad(raw["scale"].reshape(1, N).astype(jnp.float32),
                      ((0, 0), (0, N_pad - N)))
    bias_p = jnp.pad(raw["bias"].reshape(1, N).astype(jnp.float32),
                     ((0, 0), (0, N_pad - N)))
    return {"w": w_p, "scale": scale_p, "bias": bias_p, "K": K, "N": N}


def init_params(key):
    keys = iter(jax.random.split(key, 32))
    nk = lambda: next(keys)

    def conv(kh, kw, cin, cout, bn):
        return prepare_conv(conv_params(nk(), kh, kw, cin, cout, bn), kh, kw, cin, cout)

    P = {}
    P["down1"] = [conv(3, 3, 3, 300, True), conv(3, 3, 300, 300, True)]
    P["down2"] = [conv(3, 3, 300, 512, True), conv(3, 3, 512, 512, True)]
    P["down3"] = [conv(3, 3, 512, 1024, True), conv(3, 3, 1024, 1024, True)]
    P["down4"] = [conv(3, 3, 1024, 2048, True), conv(3, 3, 2048, 2048, True)]
    P["up31"] = conv(3, 3, 3072, 2048, True)
    P["up32"] = conv(3, 3, 2048, 1024, True)
    P["up21"] = conv(3, 3, 1536, 1024, True)
    P["up22"] = conv(3, 3, 1024, 512, True)
    P["up11"] = conv(3, 3, 812, 512, True)
    P["up12"] = conv(3, 3, 512, 300, True)
    P["dconv"] = conv(1, 1, 300, 256, False)              # 1x1 + sigmoid

    # 1-channel tail convs run on the VPU; keep folded scalar taps.
    raw1 = conv_params(nk(), 3, 3, 1, 1, True)            # 3x3 1->1 + BN + relu
    P["dconv1_taps"] = jnp.concatenate(
        [raw1["w"].reshape(9) * raw1["scale"][0], raw1["bias"]]).astype(jnp.float32)
    raw2 = conv_params(nk(), 1, 1, 1, 3, False)           # 1x1 1->3 + sigmoid
    P["dconv2_w"] = (raw2["w"].reshape(3) * raw2["scale"]).astype(jnp.float32)
    P["dconv2_b"] = raw2["bias"].astype(jnp.float32)
    return P


# ----------------------------------------------------------------------------
# Full forward pass (interface NCHW, like PyTorch)
# ----------------------------------------------------------------------------
def unet_forward(params, x_nchw):
    x = jnp.transpose(x_nchw, (0, 2, 3, 1)).astype(jnp.bfloat16)  # NHWC bf16

    conv1 = double_conv_apply(x, params["down1"])
    xp = maxpool2(conv1)
    conv2 = double_conv_apply(xp, params["down2"])
    xp = maxpool2(conv2)
    conv3 = double_conv_apply(xp, params["down3"])
    xp = maxpool2(conv3)
    xp = double_conv_apply(xp, params["down4"])
    # Dropout(0.5): identity in inference mode.
    xp = upsample_bilinear_2x(xp)
    xp = jnp.concatenate([xp, conv3], axis=-1)
    xp = conv3x3_fused(xp, params["up31"])
    xp = conv3x3_fused(xp, params["up32"])
    xp = upsample_bilinear_2x(xp)
    xp = jnp.concatenate([xp, conv2], axis=-1)
    xp = conv3x3_fused(xp, params["up21"])
    xp = conv3x3_fused(xp, params["up22"])
    xp = upsample_bilinear_2x(xp)
    xp = jnp.concatenate([xp, conv1], axis=-1)
    xp = conv3x3_fused(xp, params["up11"])
    xp = conv3x3_fused(xp, params["up12"])
    out1 = conv1x1_fused(xp, params["dconv"], act="sigmoid",
                         out_dtype=jnp.float32)                   # (B,H,W,256)

    # Reference tail: apply the SAME (3x3 conv 1->1, BN, ReLU) to every channel
    # plane independently, sum over channels, then 1x1 conv 1->3 + sigmoid.
    s = per_plane_conv3x3_sum(out1, params["dconv1_taps"])        # (B,H,W)
    out2 = jax.nn.sigmoid(s[..., None] * params["dconv2_w"]
                          + params["dconv2_b"])                   # (B,H,W,3)

    out1_nchw = jnp.transpose(out1, (0, 3, 1, 2))                 # (B,256,H,W)
    out2_nchw = jnp.transpose(out2, (0, 3, 1, 2))                 # (B,3,H,W)
    return out1_nchw, out2_nchw


# ----------------------------------------------------------------------------
if __name__ == "__main__":
    key = jax.random.PRNGKey(0)
    kp, kx = jax.random.split(key)
    params = init_params(kp)

    B, H, W = 2, 16, 16
    x = jax.random.normal(kx, (B, 3, H, W), jnp.float32)  # NCHW, 3 input channels

    out1, out2 = unet_forward(params, x)
    out1 = jax.block_until_ready(out1)
    out2 = jax.block_until_ready(out2)

    assert out1.shape == (B, 256, H, W), out1.shape
    assert out2.shape == (B, 3, H, W), out2.shape
    assert bool(jnp.isfinite(out1).all()) and bool(jnp.isfinite(out2).all())
    # sigmoid outputs must lie in [0, 1]
    assert float(out1.min()) >= 0.0 and float(out1.max()) <= 1.0
    assert float(out2.min()) >= 0.0 and float(out2.max()) <= 1.0

    print("KERNEL_OK")
</pallas_src>

<mosaic_0001>
module attributes {stable_mosaic.version = 11 : i64} {
  func.func @_fused_matmul_kernel(%arg0: i32, %arg1: i32, %arg2: i32, %arg3: memref<256x128xbf16, #tpu.memory_space<vmem>>, %arg4: memref<128x384xbf16, #tpu.memory_space<vmem>>, %arg5: memref<1x384xf32, #tpu.memory_space<vmem>>, %arg6: memref<1x384xf32, #tpu.memory_space<vmem>>, %arg7: memref<256x384xbf16, #tpu.memory_space<vmem>>, %arg8: memref<256x384xf32, #tpu.memory_space<vmem>>) attributes {dimension_semantics = [#tpu.dimension_semantics<parallel>, #tpu.dimension_semantics<parallel>, #tpu.dimension_semantics<arbitrary>], iteration_bounds = array<i64: 2, 1, 1>, scalar_prefetch = 0 : i64, scratch_operands = 1 : i64, tpu.core_type = #tpu.core_type<tc>, window_params = [{transform_indices = @transform_0, window_bounds = array<i64: 256, 128>}, {transform_indices = @transform_1, window_bounds = array<i64: 128, 384>}, {transform_indices = @transform_2, window_bounds = array<i64: 1, 384>}, {transform_indices = @transform_3, window_bounds = array<i64: 1, 384>}, {transform_indices = @transform_4, window_bounds = array<i64: 256, 384>}]} {
    %c0_i32 = arith.constant 0 : i32
    %0 = arith.cmpi eq, %arg2, %c0_i32 : i32
    %1 = arith.extui %0 : i1 to i32
    %c0_i32_0 = arith.constant 0 : i32
    %2 = arith.cmpi ne, %1, %c0_i32_0 : i32
    scf.if %2 {
      %cst_10 = arith.constant 0.000000e+00 : f32
      %12 = vector.broadcast %cst_10 : f32 to vector<256x384xf32>
      %c0_11 = arith.constant 0 : index
      %c0_12 = arith.constant 0 : index
      %13 = vector.load %arg8[%c0_11, %c0_12] : memref<256x384xf32, #tpu.memory_space<vmem>>, vector<256x384xf32>
      tpu.vector_store %arg8[%c0_11, %c0_12], %12 {strides = array<i32>} : memref<256x384xf32, #tpu.memory_space<vmem>>, vector<256x384xf32>,
    } else {
    }
    %c0 = arith.constant 0 : index
    %c0_1 = arith.constant 0 : index
    %3 = vector.load %arg8[%c0, %c0_1] : memref<256x384xf32, #tpu.memory_space<vmem>>, vector<256x384xf32>
    %c0_2 = arith.constant 0 : index
    %c0_3 = arith.constant 0 : index
    %4 = vector.load %arg3[%c0_2, %c0_3] : memref<256x128xbf16, #tpu.memory_space<vmem>>, vector<256x128xbf16>
    %c0_4 = arith.constant 0 : index
    %c0_5 = arith.constant 0 : index
    %5 = vector.load %arg4[%c0_4, %c0_5] : memref<128x384xbf16, #tpu.memory_space<vmem>>, vector<128x384xbf16>
    %cst = arith.constant dense<0.000000e+00> : vector<256x384xf32>
    %6 = tpu.matmul %4, %5, %cst {dimension_numbers = #tpu.dot_dimension_numbers<[1], [0], [0], [1], [0, 0, 1, 1], [], []>} : vector<256x128xbf16>, vector<128x384xbf16>, vector<256x384xf32> -> vector<256x384xf32>
    %7 = arith.addf %3, %6 : vector<256x384xf32>
    %c0_6 = arith.constant 0 : index
    %c0_7 = arith.constant 0 : index
    %8 = vector.load %arg8[%c0_6, %c0_7] : memref<256x384xf32, #tpu.memory_space<vmem>>, vector<256x384xf32>
    tpu.vector_store %arg8[%c0_6, %c0_7], %7 {strides = array<i32>} : memref<256x384xf32, #tpu.memory_space<vmem>>, vector<256x384xf32>,
    %c0_i32_8 = arith.constant 0 : i32
    %9 = arith.cmpi eq, %arg2, %c0_i32_8 : i32
    %10 = arith.extui %9 : i1 to i32
    %c0_i32_9 = arith.constant 0 : i32
    %11 = arith.cmpi ne, %10, %c0_i32_9 : i32
    scf.if %11 {
      %c0_10 = arith.constant 0 : index
      %c0_11 = arith.constant 0 : index
      %12 = vector.load %arg8[%c0_10, %c0_11] : memref<256x384xf32, #tpu.memory_space<vmem>>, vector<256x384xf32>
      %c0_12 = arith.constant 0 : index
      %c0_13 = arith.constant 0 : index
      %13 = vector.load %arg5[%c0_12, %c0_13] : memref<1x384xf32, #tpu.memory_space<vmem>>, vector<1x384xf32>
      %14 = vector.broadcast %13 : vector<1x384xf32> to vector<256x384xf32>
      %15 = arith.mulf %12, %14 : vector<256x384xf32>
      %c0_14 = arith.constant 0 : index
      %c0_15 = arith.constant 0 : index
      %16 = vector.load %arg6[%c0_14, %c0_15] : memref<1x384xf32, #tpu.memory_space<vmem>>, vector<1x384xf32>
      %17 = vector.broadcast %16 : vector<1x384xf32> to vector<256x384xf32>
      %18 = arith.addf %15, %17 : vector<256x384xf32>
      %cst_16 = arith.constant 0.000000e+00 : f32
      %19 = vector.broadcast %cst_16 : f32 to vector<256x384xf32>
      %20 = arith.maximumf %18, %19 : vector<256x384xf32>
      %21 = arith.truncf %20 : vector<256x384xf32> to vector<256x384xbf16>
      %c0_17 = arith.constant 0 : index
      %c0_18 = arith.constant 0 : index
      %22 = vector.load %arg7[%c0_17, %c0_18] : memref<256x384xbf16, #tpu.memory_space<vmem>>, vector<256x384xbf16>
      tpu.vector_store %arg7[%c0_17, %c0_18], %21 {strides = array<i32>} : memref<256x384xbf16, #tpu.memory_space<vmem>>, vector<256x384xbf16>,
    } else {
    }
    return
  }
  func.func @transform_0(%arg0: i32, %arg1: i32, %arg2: i32) -> (i32, i32) {
    %c0_i32 = arith.constant 0 : i32
    return %arg0, %arg2 : i32, i32
  }
  func.func @transform_1(%arg0: i32, %arg1: i32, %arg2: i32) -> (i32, i32) {
    %c0_i32 = arith.constant 0 : i32
    return %arg2, %arg1 : i32, i32
  }
  func.func @transform_2(%arg0: i32, %arg1: i32, %arg2: i32) -> (i32, i32) {
    %c0_i32 = arith.constant 0 : i32
    %c0_i32_0 = arith.constant 0 : i32
    return %c0_i32, %arg1 : i32, i32
  }
  func.func @transform_3(%arg0: i32, %arg1: i32, %arg2: i32) -> (i32, i32) {
    %c0_i32 = arith.constant 0 : i32
    %c0_i32_0 = arith.constant 0 : i32
    return %c0_i32, %arg1 : i32, i32
  }
  func.func @transform_4(%arg0: i32, %arg1: i32, %arg2: i32) -> (i32, i32) {
    %c0_i32 = arith.constant 0 : i32
    return %arg0, %arg1 : i32, i32
  }
}

</mosaic_0001>

<llo_original>
// kernel: tpu_custom_call.1
$region0: #{tpu_custom_call.1}
  #allocation0 [shape = 'u32[]', space=smem, size = 0x4, offset = 0x4, fixed_abs, tag = 'smem constant byte address 0x4 - core index']
  #allocation1 [shape = 'u32[72,128]{1,0:T(1,128)}', space=vmem, size = 0x9000, scoped, tag = 'internal scratch']
  #allocation2 [shape = 'f32[256,384]{1,0:T(8,128)}', space=vmem, size = 0x60000, scoped, tag = 'scratch operand']
  %s0 = inlined_call_operand.hbm [shape: bf16[512,128], index: 0, kind: input, shape index: {}]
  %s1 = inlined_call_operand.hbm [shape: bf16[128,384], index: 1, kind: input, shape index: {}]
  %s2 = inlined_call_operand.hbm [shape: f32[1,384], index: 2, kind: input, shape index: {}]
  %s3 = inlined_call_operand.hbm [shape: f32[1,384], index: 3, kind: input, shape index: {}]
  %s4 = inlined_call_operand.hbm [shape: bf16[512,384], index: 4, kind: output, shape index: {}]
  %s5 = sld [smem:[#allocation0]]
  $region73: #{tpu_custom_call.1} parent=0
    _
  %s7 = ssub.s32 1, %s5
  %s8 = scalar_select 0, %s7, %s5
  $region1: #{tpu_custom_call.1} parent=0
    #allocation3 [shape = 'u8[131072]{0}', space=vmem, size = 0x20000, scoped, tag = 'input window, operand 0']
    #allocation4 [shape = 's32[2]{0}', space=sflag, size = 0x8, scoped, tag = 'scoped memory for tpu_custom_call.1']
    #allocation5 [shape = 's32[2]{0}', space=sflag, size = 0x8, scoped, tag = 'scoped memory for tpu_custom_call.1']
    #allocation6 [shape = 'u8[98304]{0}', space=vmem, size = 0x18000, scoped, tag = 'input window, operand 1, single buffered']
    #allocation7 [shape = 's32[1]{0}', space=sflag, size = 0x4, scoped, tag = 'scoped memory for tpu_custom_call.1']
    #allocation8 [shape = 'u8[1536]{0}', space=vmem, size = 0x800, scoped, tag = 'input window, operand 2, single buffered']
    #allocation9 [shape = 'u8[1536]{0}', space=vmem, size = 0x800, scoped, tag = 'input window, operand 3, single buffered']
    #allocation10 [shape = 's32[1]{0}', space=sflag, size = 0x4, scoped, tag = 'scoped memory for tpu_custom_call.1']
    #allocation11 [shape = 'u8[393216]{0}', space=vmem, size = 0x60000, scoped, tag = 'output window, operand 0']
    %9 = vsyncpa [#allocation4], 0
    %s10 = scalar_lea.sflag [#allocation4], 1
    %11 = vsyncpa %s10, 0
    %12 = vsyncpa [#allocation7], 0
    %13 = vsyncpa [#allocation10], 0
    %14 = vsyncpa [#allocation5], 0
    %s15 = scalar_lea.sflag [#allocation5], 1
    %16 = vsyncpa %s15, 0
    loop: start=0, step=1, limit=4
    $region2: #{tpu_custom_call.1} parent=1 // loop_pre_header
      _
    $region3: #{tpu_custom_call.1} parent=1 // loop_header
      %s18 = sphi 0, %s22
      %p19 = scmp.ge.s32.totalorder %s18, 4
      %s25 = sphi 0, %s44
      %s26 = sphi 0, %s40
      %s27 = sphi 0, %s36
      %s28 = sphi 0, %s25
      %s29 = sphi 0, %s26
      %s30 = sphi 0, %s27
      %s31 = sphi 0, %s28
      %s32 = sphi 0, %s29
      %s33 = sphi 0, %s30
      %s49 = sphi 0, %s51
      %s52 = sphi 0, %s49
      %s53 = sphi 0, %s52
      %s69 = sphi 0, %s53
      %s77 = sphi 0, %s79
      %s80 = sphi 0, %s77
      %s81 = sphi 0, %s80
      %s97 = sphi 0, %s81
      %s103 = sphi 0, %s105
      %s106 = sphi 0, %s103
      %s107 = sphi 0, %s106
      %s123 = sphi 0, %s107
      %s129 = sphi 0, %s131
      %s132 = sphi 0, %s129
      %s133 = sphi 0, %s132
      %s149 = sphi 0, %s133
      %s157 = sphi 0, %s159
      %s160 = sphi 0, %s157
      %s161 = sphi 0, %s160
      %s177 = sphi 0, %s161
    $region4: #{tpu_custom_call.1} parent=1 // loop_header_branch
      %21 = sbr.rel (%p19) target = $region8
    $region5: #{tpu_custom_call.1} parent=1 // loop_body
      %s23 = ssub.s32 %s18, 1
      %s24 = ssub.s32 %s18, 2
      %s34 = sadd.s32 1, %s27
      %p35 = scmp.ge.s32.totalorder %s34, 1
      %s36 = scalar_select %p35, 0, %s34
      %s37 = sadd.s32 1, %s26
      %s38 = scalar_select %p35, %s37, %s26
      %p39 = scmp.ge.s32.totalorder %s38, 1
      %s40 = scalar_select %p39, 0, %s38
      %s41 = sadd.s32 1, %s25
      %s42 = scalar_select %p39, %s41, %s25
      %p43 = scmp.ge.s32.totalorder %s42, 2
      %s44 = scalar_select %p43, 0, %s42
      %s45 = ssub.s32 %s25, %s44
      %s46 = ssub.s32 %s27, %s36
      %s47 = sor.u32 %s45, %s46
      %p48 = scmp.eq.s32.totalorder %s47, 0
      %s50 = sadd.s32 %s49, 1
      %s51 = scalar_select %p48, %s49, %s50
      %p54 = pneg %p48
      %p55 = scmp.eq.s32.totalorder %s18, 1
      %p56 = por %p54, %p55
      %p57 = scmp.ne.s32.totalorder %s49, %s52
      %p58 = scmp.eq.s32.totalorder %s18, 0
      %p59 = por %p57, %p58
      %p60 = scmp.ne.s32.totalorder %s49, %s52
      %p61 = scmp.eq.s32.totalorder %s23, 1
      %p62 = por %p60, %p61
      %p63 = scmp.ne.s32.totalorder %s52, %s53
      %p64 = scmp.eq.s32.totalorder %s23, 0
      %p65 = por %p63, %p64
      %p66 = scmp.ne.s32.totalorder %s52, %s53
      %p67 = scmp.eq.s32.totalorder %s24, 1
      %p68 = por %p66, %p67
      %p70 = scmp.ne.s32.totalorder %s53, %s69
      %p71 = scmp.eq.s32.totalorder %s24, 0
      %p72 = por %p70, %p71
      %s73 = ssub.s32 %s27, %s36
      %s74 = ssub.s32 %s26, %s40
      %s75 = sor.u32 %s73, %s74
      %p76 = scmp.eq.s32.totalorder %s75, 0
      %s78 = sadd.s32 %s77, 1
      %s79 = scalar_select %p76, %s77, %s78
      %p82 = pneg %p76
      %p83 = scmp.eq.s32.totalorder %s18, 1
      %p84 = por %p82, %p83
      %p85 = scmp.ne.s32.totalorder %s77, %s80
      %p86 = scmp.eq.s32.totalorder %s18, 0
      %p87 = por %p85, %p86
      %p88 = scmp.ne.s32.totalorder %s77, %s80
      %p89 = scmp.eq.s32.totalorder %s23, 1
      %p90 = por %p88, %p89
      %p91 = scmp.ne.s32.totalorder %s80, %s81
      %p92 = scmp.eq.s32.totalorder %s23, 0
      %p93 = por %p91, %p92
      %p94 = scmp.ne.s32.totalorder %s80, %s81
      %p95 = scmp.eq.s32.totalorder %s24, 1
      %p96 = por %p94, %p95
      %p98 = scmp.ne.s32.totalorder %s81, %s97
      %p99 = scmp.eq.s32.totalorder %s24, 0
      %p100 = por %p98, %p99
      %s101 = ssub.s32 %s26, %s40
      %p102 = scmp.eq.s32.totalorder %s101, 0
      %s104 = sadd.s32 %s103, 1
      %s105 = scalar_select %p102, %s103, %s104
      %p108 = pneg %p102
      %p109 = scmp.eq.s32.totalorder %s18, 1
      %p110 = por %p108, %p109
      %p111 = scmp.ne.s32.totalorder %s103, %s106
      %p112 = scmp.eq.s32.totalorder %s18, 0
      %p113 = por %p111, %p112
      %p114 = scmp.ne.s32.totalorder %s103, %s106
      %p115 = scmp.eq.s32.totalorder %s23, 1
      %p116 = por %p114, %p115
      %p117 = scmp.ne.s32.totalorder %s106, %s107
      %p118 = scmp.eq.s32.totalorder %s23, 0
      %p119 = por %p117, %p118
      %p120 = scmp.ne.s32.totalorder %s106, %s107
      %p121 = scmp.eq.s32.totalorder %s24, 1
      %p122 = por %p120, %p121
      %p124 = scmp.ne.s32.totalorder %s107, %s123
      %p125 = scmp.eq.s32.totalorder %s24, 0
      %p126 = por %p124, %p125
      %s127 = ssub.s32 %s26, %s40
      %p128 = scmp.eq.s32.totalorder %s127, 0
      %s130 = sadd.s32 %s129, 1
      %s131 = scalar_select %p128, %s129, %s130
      %p134 = pneg %p128
      %p135 = scmp.eq.s32.totalorder %s18, 1
      %p136 = por %p134, %p135
      %p137 = scmp.ne.s32.totalorder %s129, %s132
      %p138 = scmp.eq.s32.totalorder %s18, 0
      %p139 = por %p137, %p138
      %p140 = scmp.ne.s32.totalorder %s129, %s132
      %p141 = scmp.eq.s32.totalorder %s23, 1
      %p142 = por %p140, %p141
      %p143 = scmp.ne.s32.totalorder %s132, %s133
      %p144 = scmp.eq.s32.totalorder %s23, 0
      %p145 = por %p143, %p144
      %p146 = scmp.ne.s32.totalorder %s132, %s133
      %p147 = scmp.eq.s32.totalorder %s24, 1
      %p148 = por %p146, %p147
      %p150 = scmp.ne.s32.totalorder %s133, %s149
      %p151 = scmp.eq.s32.totalorder %s24, 0
      %p152 = por %p150, %p151
      %s153 = ssub.s32 %s25, %s44
      %s154 = ssub.s32 %s26, %s40
      %s155 = sor.u32 %s153, %s154
      %p156 = scmp.eq.s32.totalorder %s155, 0
      %s158 = sadd.s32 %s157, 1
      %s159 = scalar_select %p156, %s157, %s158
      %p162 = pneg %p156
      %p163 = scmp.eq.s32.totalorder %s18, 1
      %p164 = por %p162, %p163
      %p165 = scmp.ne.s32.totalorder %s157, %s160
      %p166 = scmp.eq.s32.totalorder %s18, 0
      %p167 = por %p165, %p166
      %p168 = scmp.ne.s32.totalorder %s157, %s160
      %p169 = scmp.eq.s32.totalorder %s23, 1
      %p170 = por %p168, %p169
      %p171 = scmp.ne.s32.totalorder %s160, %s161
      %p172 = scmp.eq.s32.totalorder %s23, 0
      %p173 = por %p171, %p172
      %p174 = scmp.ne.s32.totalorder %s160, %s161
      %p175 = scmp.eq.s32.totalorder %s24, 1
      %p176 = por %p174, %p175
      %p178 = scmp.ne.s32.totalorder %s161, %s177
      %p179 = scmp.eq.s32.totalorder %s24, 0
      %p180 = por %p178, %p179
      %p181 = scmp.le.s32.totalorder 1, %s18
      %p182 = scmp.lt.s32.totalorder %s18, 3
      %p183 = pnand %p181, %p182
      %p184 = pneg %p183
      // Predicated region
      $region9: #{tpu_custom_call.1} parent=5 // pred_check
        _
      $region10: #{tpu_custom_call.1} parent=5 // pred_check_branch
        %186 = sbr.rel (%p183) target = $region12
      $region11: #{tpu_custom_call.1} parent=5 // pred_region
        %s187 = ssub.s32 %s18, 1
        // Predicated region
        $region13: #{tpu_custom_call.1} parent=11 // pred_check
          %p188 = pneg %p93
        $region14: #{tpu_custom_call.1} parent=11 // pred_check_branch
          %190 = sbr.rel (%p188) target = $region16
        $region15: #{tpu_custom_call.1} parent=11 // pred_region
          %s191 = smul.u32 16, %s30
          %s192 = smul.u32 3, %s29
          %194 = vsyncadd [#allocation7], 0
          %s195 = smul.addr %s191, 3
          %s196 = sadd.s32 %s192, %s195
          %s197 = smul.addr %s196, 4
          %s198 = scalar_lea.hbm %s1, %s197
          %s199 = sshll.u32 %s198, 4
          %s200 = int_to_ptr.hbm [resolvable:$true] %s199
          %s201 = sshll.u32 [#allocation6], 4
          %s202 = int_to_ptr.vmem [resolvable:$true] %s201
          %207 = dma.hbm_to_vmem [thread:$0]  %s200, 3072, %s202, [#allocation7], 192, 192, 12
        $region16: #{tpu_custom_call.1} parent=11 // pred_fallthru
          _
        // Predicated region
        $region17: #{tpu_custom_call.1} parent=11 // pred_check
          %p208 = pneg %p119
        $region18: #{tpu_custom_call.1} parent=11 // pred_check_branch
          %210 = sbr.rel (%p208) target = $region20
        $region19: #{tpu_custom_call.1} parent=11 // pred_region
          %s211 = smul.u32 3, %s29
          %213 = vsyncadd [#allocation7], 0
          %s214 = scalar_lea.hbm %s2, %s211
          %s216 = sshll.u32 %s214, 4
          %s217 = int_to_ptr.hbm [resolvable:$true] %s216
          %s218 = sshll.u32 [#allocation8], 4
          %s219 = int_to_ptr.vmem [resolvable:$true] %s218
          %221 = dma.hbm_to_vmem [thread:$0]  %s217, 48, %s219, [#allocation7]
        $region20: #{tpu_custom_call.1} parent=11 // pred_fallthru
          _
        // Predicated region
        $region21: #{tpu_custom_call.1} parent=11 // pred_check
          %p222 = pneg %p145
        $region22: #{tpu_custom_call.1} parent=11 // pred_check_branch
          %224 = sbr.rel (%p222) target = $region24
        $region23: #{tpu_custom_call.1} parent=11 // pred_region
          %s225 = smul.u32 3, %s29
          %227 = vsyncadd [#allocation10], 0
          %s228 = scalar_lea.hbm %s3, %s225
          %s230 = sshll.u32 %s228, 4
          %s231 = int_to_ptr.hbm [resolvable:$true] %s230
          %s232 = sshll.u32 [#allocation9], 4
          %s233 = int_to_ptr.vmem [resolvable:$true] %s232
          %235 = dma.hbm_to_vmem [thread:$0]  %s231, 48, %s233, [#allocation10]
        $region24: #{tpu_custom_call.1} parent=11 // pred_fallthru
          _
      $region12: #{tpu_custom_call.1} parent=5 // pred_fallthru
        _
      %p236 = scmp.lt.s32.totalorder %s18, 2
      // Predicated region
      $region25: #{tpu_custom_call.1} parent=5 // pred_check
        %p237 = pneg %p236
      $region26: #{tpu_custom_call.1} parent=5 // pred_check_branch
        %239 = sbr.rel (%p237) target = $region28
      $region27: #{tpu_custom_call.1} parent=5 // pred_region
        // Predicated region
        $region29: #{tpu_custom_call.1} parent=27 // pred_check
          %p240 = pneg %p59
        $region30: #{tpu_custom_call.1} parent=27 // pred_check_branch
          %242 = sbr.rel (%p240) target = $region32
        $region31: #{tpu_custom_call.1} parent=27 // pred_region
          %s243 = sand.u32 %s49, 1
          %s244 = scalar_lea.sflag [#allocation4], %s243
          %s245 = sand.u32 %s49, 1
          %s246 = smul.addr %s245, 128
          %s247 = scalar_lea.vmem [#allocation3], %s246
          %s248 = smul.u32 32, %s25
          %250 = vsyncadd %s244, 0
          %s251 = sadd.s32 %s27, %s248
          %s252 = smul.addr %s251, 4
          %s253 = scalar_lea.hbm %s0, %s252
          %s254 = sshll.u32 %s253, 4
          %s255 = int_to_ptr.hbm [resolvable:$true] %s254
          %s256 = sshll.u32 %s247, 4
          %s257 = int_to_ptr.vmem [resolvable:$true] %s256
          %262 = dma.hbm_to_vmem [thread:$0]  %s255, 2048, %s257, %s244, 64, 64, 4
        $region32: #{tpu_custom_call.1} parent=27 // pred_fallthru
          _
      $region28: #{tpu_custom_call.1} parent=5 // pred_fallthru
        _
      %p263 = scmp.le.s32.totalorder 1, %s18
      %p264 = scmp.lt.s32.totalorder %s18, 3
      %p265 = pnand %p263, %p264
      %p266 = pneg %p265
      // Predicated region
      $region33: #{tpu_custom_call.1} parent=5 // pred_check
        _
      $region34: #{tpu_custom_call.1} parent=5 // pred_check_branch
        %268 = sbr.rel (%p265) target = $region36
      $region35: #{tpu_custom_call.1} parent=5 // pred_region
        %s269 = ssub.s32 %s18, 1
        %s270 = sand.u32 %s52, 1
        %s271 = scalar_lea.sflag [#allocation4], %s270
        %s272 = sand.u32 %s52, 1
        %s273 = smul.addr %s272, 128
        %s274 = scalar_lea.vmem [#allocation3], %s273
        // Predicated region
        $region37: #{tpu_custom_call.1} parent=35 // pred_check
          %p275 = pneg %p65
        $region38: #{tpu_custom_call.1} parent=35 // pred_check_branch
          %277 = sbr.rel (%p275) target = $region40
        $region39: #{tpu_custom_call.1} parent=35 // pred_region
          %279 = dma.done %s271, 2048
        $region40: #{tpu_custom_call.1} parent=35 // pred_fallthru
          _
        // Predicated region
        $region41: #{tpu_custom_call.1} parent=35 // pred_check
          %p280 = pneg %p93
        $region42: #{tpu_custom_call.1} parent=35 // pred_check_branch
          %282 = sbr.rel (%p280) target = $region44
        $region43: #{tpu_custom_call.1} parent=35 // pred_region
          %284 = dma.done [#allocation7], 3072
        $region44: #{tpu_custom_call.1} parent=35 // pred_fallthru
          _
        // Predicated region
        $region45: #{tpu_custom_call.1} parent=35 // pred_check
          %p285 = pneg %p119
        $region46: #{tpu_custom_call.1} parent=35 // pred_check_branch
          %287 = sbr.rel (%p285) target = $region48
        $region47: #{tpu_custom_call.1} parent=35 // pred_region
          %289 = dma.done [#allocation7], 48
        $region48: #{tpu_custom_call.1} parent=35 // pred_fallthru
          _
        // Predicated region
        $region49: #{tpu_custom_call.1} parent=35 // pred_check
          %p290 = pneg %p145
        $region50: #{tpu_custom_call.1} parent=35 // pred_check_branch
          %292 = sbr.rel (%p290) target = $region52
        $region51: #{tpu_custom_call.1} parent=35 // pred_region
          %294 = dma.done [#allocation10], 48
        $region52: #{tpu_custom_call.1} parent=35 // pred_fallthru
          _
        %s295 = sand.u32 %s52, 1
        %s296 = scalar_lea.sflag [#allocation4], %s295
        %s297 = sand.u32 %s52, 1
        %s298 = smul.addr %s297, 128
        %s299 = scalar_lea.vmem [#allocation3], %s298
        %p300 = pneg %p65
        %p301 = pneg %p62
        %p302 = pneg %p93
        %p303 = pneg %p90
        %p304 = pneg %p119
        %p305 = pneg %p116
        %p306 = pneg %p145
        %p307 = pneg %p142
        %p308 = pneg %p173
        %p309 = pneg %p170
        %s310 = sand.u32 %s160, 1
        %s311 = scalar_lea.sflag [#allocation5], %s310
        %s312 = sand.u32 %s160, 1
        %s313 = smul.addr %s312, 384
        %s314 = scalar_lea.vmem [#allocation11], %s313
        %s315 = smul.u32 32, %s28
        %s316 = smul.u32 16, %s30
        %s317 = smul.u32 3, %s29
        %s318 = smul.u32 3, %s29
        %s319 = smul.u32 3, %s29
        %s320 = smul.u32 32, %s28
        %s321 = smul.u32 3, %s29
        %p322 = scmp.eq.s32.totalorder %s30, 0
        // Predicated region
        $region53: #{tpu_custom_call.1} parent=35 // pred_check
          %p323 = pneg %p322
        $region54: #{tpu_custom_call.1} parent=35 // pred_check_branch
          %325 = sbr.rel (%p323) target = $region56
        $region55: #{tpu_custom_call.1} parent=35 // pred_region
          %326 = vst [vmem:[#allocation2] sm:$0xff] 0.0
          %327 = vst [vmem:[#allocation2 + $0x8] sm:$0xff] 0.0
          %328 = vst [vmem:[#allocation2 + $0x10] sm:$0xff] 0.0
          %329 = vst [vmem:[#allocation2 + $0x18] sm:$0xff] 0.0
          %330 = vst [vmem:[#allocation2 + $0x20] sm:$0xff] 0.0
          %331 = vst [vmem:[#allocation2 + $0x28] sm:$0xff] 0.0
          %332 = vst [vmem:[#allocation2 + $0x30] sm:$0xff] 0.0
          %333 = vst [vmem:[#allocation2 + $0x38] sm:$0xff] 0.0
          %334 = vst [vmem:[#allocation2 + $0x40] sm:$0xff] 0.0
          %335 = vst [vmem:[#allocation2 + $0x48] sm:$0xff] 0.0
          %336 = vst [vmem:[#allocation2 + $0x50] sm:$0xff] 0.0
          %337 = vst [vmem:[#allocation2 + $0x58] sm:$0xff] 0.0
          %338 = vst [vmem:[#allocation2 + $0x60] sm:$0xff] 0.0
          %339 = vst [vmem:[#allocation2 + $0x68] sm:$0xff] 0.0
          %340 = vst [vmem:[#allocation2 + $0x70] sm:$0xff] 0.0
          %341 = vst [vmem:[#allocation2 + $0x78] sm:$0xff] 0.0
          %342 = vst [vmem:[#allocation2 + $0x80] sm:$0xff] 0.0
          %343 = vst [vmem:[#allocation2 + $0x88] sm:$0xff] 0.0
          %344 = vst [vmem:[#allocation2 + $0x90] sm:$0xff] 0.0
          %345 = vst [vmem:[#allocation2 + $0x98] sm:$0xff] 0.0
          %346 = vst [vmem:[#allocation2 + $0xa0] sm:$0xff] 0.0
          %347 = vst [vmem:[#allocation2 + $0xa8] sm:$0xff] 0.0
          %348 = vst [vmem:[#allocation2 + $0xb0] sm:$0xff] 0.0
          %349 = vst [vmem:[#allocation2 + $0xb8] sm:$0xff] 0.0
          %350 = vst [vmem:[#allocation2 + $0xc0] sm:$0xff] 0.0
          %351 = vst [vmem:[#allocation2 + $0xc8] sm:$0xff] 0.0
          %352 = vst [vmem:[#allocation2 + $0xd0] sm:$0xff] 0.0
          %353 = vst [vmem:[#allocation2 + $0xd8] sm:$0xff] 0.0
          %354 = vst [vmem:[#allocation2 + $0xe0] sm:$0xff] 0.0
          %355 = vst [vmem:[#allocation2 + $0xe8] sm:$0xff] 0.0
          %356 = vst [vmem:[#allocation2 + $0xf0] sm:$0xff] 0.0
          %357 = vst [vmem:[#allocation2 + $0xf8] sm:$0xff] 0.0
          %358 = vst [vmem:[#allocation2 + $0x100] sm:$0xff] 0.0
          %359 = vst [vmem:[#allocation2 + $0x108] sm:$0xff] 0.0
          %360 = vst [vmem:[#allocation2 + $0x110] sm:$0xff] 0.0
          %361 = vst [vmem:[#allocation2 + $0x118] sm:$0xff] 0.0
          %362 = vst [vmem:[#allocation2 + $0x120] sm:$0xff] 0.0
          %363 = vst [vmem:[#allocation2 + $0x128] sm:$0xff] 0.0
          %364 = vst [vmem:[#allocation2 + $0x130] sm:$0xff] 0.0
          %365 = vst [vmem:[#allocation2 + $0x138] sm:$0xff] 0.0
          %366 = vst [vmem:[#allocation2 + $0x140] sm:$0xff] 0.0
          %367 = vst [vmem:[#allocation2 + $0x148] sm:$0xff] 0.0
          %368 = vst [vmem:[#allocation2 + $0x150] sm:$0xff] 0.0
          %369 = vst [vmem:[#allocation2 + $0x158] sm:$0xff] 0.0
          %370 = vst [vmem:[#allocation2 + $0x160] sm:$0xff] 0.0
          %371 = vst [vmem:[#allocation2 + $0x168] sm:$0xff] 0.0
          %372 = vst [vmem:[#allocation2 + $0x170] sm:$0xff] 0.0
          %373 = vst [vmem:[#allocation2 + $0x178] sm:$0xff] 0.0
          %374 = vst [vmem:[#allocation2 + $0x180] sm:$0xff] 0.0
          %375 = vst [vmem:[#allocation2 + $0x188] sm:$0xff] 0.0
          %376 = vst [vmem:[#allocation2 + $0x190] sm:$0xff] 0.0
          %377 = vst [vmem:[#allocation2 + $0x198] sm:$0xff] 0.0
          %378 = vst [vmem:[#allocation2 + $0x1a0] sm:$0xff] 0.0
          %379 = vst [vmem:[#allocation2 + $0x1a8] sm:$0xff] 0.0
          %380 = vst [vmem:[#allocation2 + $0x1b0] sm:$0xff] 0.0
          %381 = vst [vmem:[#allocation2 + $0x1b8] sm:$0xff] 0.0
          %382 = vst [vmem:[#allocation2 + $0x1c0] sm:$0xff] 0.0
          %383 = vst [vmem:[#allocation2 + $0x1c8] sm:$0xff] 0.0
          %384 = vst [vmem:[#allocation2 + $0x1d0] sm:$0xff] 0.0
          %385 = vst [vmem:[#allocation2 + $0x1d8] sm:$0xff] 0.0
          %386 = vst [vmem:[#allocation2 + $0x1e0] sm:$0xff] 0.0
          %387 = vst [vmem:[#allocation2 + $0x1e8] sm:$0xff] 0.0
          %388 = vst [vmem:[#allocation2 + $0x1f0] sm:$0xff] 0.0
          %389 = vst [vmem:[#allocation2 + $0x1f8] sm:$0xff] 0.0
          %390 = vst [vmem:[#allocation2 + $0x200] sm:$0xff] 0.0
          %391 = vst [vmem:[#allocation2 + $0x208] sm:$0xff] 0.0
          %392 = vst [vmem:[#allocation2 + $0x210] sm:$0xff] 0.0
          %393 = vst [vmem:[#allocation2 + $0x218] sm:$0xff] 0.0
          %394 = vst [vmem:[#allocation2 + $0x220] sm:$0xff] 0.0
          %395 = vst [vmem:[#allocation2 + $0x228] sm:$0xff] 0.0
          %396 = vst [vmem:[#allocation2 + $0x230] sm:$0xff] 0.0
          %397 = vst [vmem:[#allocation2 + $0x238] sm:$0xff] 0.0
          %398 = vst [vmem:[#allocation2 + $0x240] sm:$0xff] 0.0
          %399 = vst [vmem:[#allocation2 + $0x248] sm:$0xff] 0.0
          %400 = vst [vmem:[#allocation2 + $0x250] sm:$0xff] 0.0
          %401 = vst [vmem:[#allocation2 + $0x258] sm:$0xff] 0.0
          %402 = vst [vmem:[#allocation2 + $0x260] sm:$0xff] 0.0
          %403 = vst [vmem:[#allocation2 + $0x268] sm:$0xff] 0.0
          %404 = vst [vmem:[#allocation2 + $0x270] sm:$0xff] 0.0
          %405 = vst [vmem:[#allocation2 + $0x278] sm:$0xff] 0.0
          %406 = vst [vmem:[#allocation2 + $0x280] sm:$0xff] 0.0
          %407 = vst [vmem:[#allocation2 + $0x288] sm:$0xff] 0.0
          %408 = vst [vmem:[#allocation2 + $0x290] sm:$0xff] 0.0
          %409 = vst [vmem:[#allocation2 + $0x298] sm:$0xff] 0.0
          %410 = vst [vmem:[#allocation2 + $0x2a0] sm:$0xff] 0.0
          %411 = vst [vmem:[#allocation2 + $0x2a8] sm:$0xff] 0.0
          %412 = vst [vmem:[#allocation2 + $0x2b0] sm:$0xff] 0.0
          %413 = vst [vmem:[#allocation2 + $0x2b8] sm:$0xff] 0.0
          %414 = vst [vmem:[#allocation2 + $0x2c0] sm:$0xff] 0.0
          %415 = vst [vmem:[#allocation2 + $0x2c8] sm:$0xff] 0.0
          %416 = vst [vmem:[#allocation2 + $0x2d0] sm:$0xff] 0.0
          %417 = vst [vmem:[#allocation2 + $0x2d8] sm:$0xff] 0.0
          %418 = vst [vmem:[#allocation2 + $0x2e0] sm:$0xff] 0.0
          %419 = vst [vmem:[#allocation2 + $0x2e8] sm:$0xff] 0.0
          %420 = vst [vmem:[#allocation2 + $0x2f0] sm:$0xff] 0.0
          %421 = vst [vmem:[#allocation2 + $0x2f8] sm:$0xff] 0.0
        $region56: #{tpu_custom_call.1} parent=35 // pred_fallthru
          _
        %v422 = vld [vmem:[#allocation2] sm:$0xff]
        %v423 = vld [vmem:[#allocation2 + $0x8] sm:$0xff]
        %v424 = vld [vmem:[#allocation2 + $0x10] sm:$0xff]
        %v425 = vld [vmem:[#allocation2 + $0x18] sm:$0xff]
        %v426 = vld [vmem:[#allocation2 + $0x20] sm:$0xff]
        %v427 = vld [vmem:[#allocation2 + $0x28] sm:$0xff]
        %v428 = vld [vmem:[#allocation2 + $0x30] sm:$0xff]
        %v429 = vld [vmem:[#allocation2 + $0x38] sm:$0xff]
        %v430 = vld [vmem:[#allocation2 + $0x40] sm:$0xff]
        %v431 = vld [vmem:[#allocation2 + $0x48] sm:$0xff]
        %v432 = vld [vmem:[#allocation2 + $0x50] sm:$0xff]
        %v433 = vld [vmem:[#allocation2 + $0x58] sm:$0xff]
        %v434 = vld [vmem:[#allocation2 + $0x60] sm:$0xff]
        %v435 = vld [vmem:[#allocation2 + $0x68] sm:$0xff]
        %v436 = vld [vmem:[#allocation2 + $0x70] sm:$0xff]
        %v437 = vld [vmem:[#allocation2 + $0x78] sm:$0xff]
        %v438 = vld [vmem:[#allocation2 + $0x80] sm:$0xff]
        %v439 = vld [vmem:[#allocation2 + $0x88] sm:$0xff]
        %v440 = vld [vmem:[#allocation2 + $0x90] sm:$0xff]
        %v441 = vld [vmem:[#allocation2 + $0x98] sm:$0xff]
        %v442 = vld [vmem:[#allocation2 + $0xa0] sm:$0xff]
        %v443 = vld [vmem:[#allocation2 + $0xa8] sm:$0xff]
        %v444 = vld [vmem:[#allocation2 + $0xb0] sm:$0xff]
        %v445 = vld [vmem:[#allocation2 + $0xb8] sm:$0xff]
        %v446 = vld [vmem:[#allocation2 + $0xc0] sm:$0xff]
        %v447 = vld [vmem:[#allocation2 + $0xc8] sm:$0xff]
        %v448 = vld [vmem:[#allocation2 + $0xd0] sm:$0xff]
        %v449 = vld [vmem:[#allocation2 + $0xd8] sm:$0xff]
        %v450 = vld [vmem:[#allocation2 + $0xe0] sm:$0xff]
        %v451 = vld [vmem:[#allocation2 + $0xe8] sm:$0xff]
        %v452 = vld [vmem:[#allocation2 + $0xf0] sm:$0xff]
        %v453 = vld [vmem:[#allocation2 + $0xf8] sm:$0xff]
        %v454 = vld [vmem:[#allocation2 + $0x100] sm:$0xff]
        %v455 = vld [vmem:[#allocation2 + $0x108] sm:$0xff]
        %v456 = vld [vmem:[#allocation2 + $0x110] sm:$0xff]
        %v457 = vld [vmem:[#allocation2 + $0x118] sm:$0xff]
        %v458 = vld [vmem:[#allocation2 + $0x120] sm:$0xff]
        %v459 = vld [vmem:[#allocation2 + $0x128] sm:$0xff]
        %v460 = vld [vmem:[#allocation2 + $0x130] sm:$0xff]
        %v461 = vld [vmem:[#allocation2 + $0x138] sm:$0xff]
        %v462 = vld [vmem:[#allocation2 + $0x140] sm:$0xff]
        %v463 = vld [vmem:[#allocation2 + $0x148] sm:$0xff]
        %v464 = vld [vmem:[#allocation2 + $0x150] sm:$0xff]
        %v465 = vld [vmem:[#allocation2 + $0x158] sm:$0xff]
        %v466 = vld [vmem:[#allocation2 + $0x160] sm:$0xff]
        %v467 = vld [vmem:[#allocation2 + $0x168] sm:$0xff]
        %v468 = vld [vmem:[#allocation2 + $0x170] sm:$0xff]
        %v469 = vld [vmem:[#allocation2 + $0x178] sm:$0xff]
        %v470 = vld [vmem:[#allocation2 + $0x180] sm:$0xff]
        %v471 = vld [vmem:[#allocation2 + $0x188] sm:$0xff]
        %v472 = vld [vmem:[#allocation2 + $0x190] sm:$0xff]
        %v473 = vld [vmem:[#allocation2 + $0x198] sm:$0xff]
        %v474 = vld [vmem:[#allocation2 + $0x1a0] sm:$0xff]
        %v475 = vld [vmem:[#allocation2 + $0x1a8] sm:$0xff]
        %v476 = vld [vmem:[#allocation2 + $0x1b0] sm:$0xff]
        %v477 = vld [vmem:[#allocation2 + $0x1b8] sm:$0xff]
        %v478 = vld [vmem:[#allocation2 + $0x1c0] sm:$0xff]
        %v479 = vld [vmem:[#allocation2 + $0x1c8] sm:$0xff]
        %v480 = vld [vmem:[#allocation2 + $0x1d0] sm:$0xff]
        %v481 = vld [vmem:[#allocation2 + $0x1d8] sm:$0xff]
        %v482 = vld [vmem:[#allocation2 + $0x1e0] sm:$0xff]
        %v483 = vld [vmem:[#allocation2 + $0x1e8] sm:$0xff]
        %v484 = vld [vmem:[#allocation2 + $0x1f0] sm:$0xff]
        %v485 = vld [vmem:[#allocation2 + $0x1f8] sm:$0xff]
        %v486 = vld [vmem:[#allocation2 + $0x200] sm:$0xff]
        %v487 = vld [vmem:[#allocation2 + $0x208] sm:$0xff]
        %v488 = vld [vmem:[#allocation2 + $0x210] sm:$0xff]
        %v489 = vld [vmem:[#allocation2 + $0x218] sm:$0xff]
        %v490 = vld [vmem:[#allocation2 + $0x220] sm:$0xff]
        %v491 = vld [vmem:[#allocation2 + $0x228] sm:$0xff]
        %v492 = vld [vmem:[#allocation2 + $0x230] sm:$0xff]
        %v493 = vld [vmem:[#allocation2 + $0x238] sm:$0xff]
        %v494 = vld [vmem:[#allocation2 + $0x240] sm:$0xff]
        %v495 = vld [vmem:[#allocation2 + $0x248] sm:$0xff]
        %v496 = vld [vmem:[#allocation2 + $0x250] sm:$0xff]
        %v497 = vld [vmem:[#allocation2 + $0x258] sm:$0xff]
        %v498 = vld [vmem:[#allocation2 + $0x260] sm:$0xff]
        %v499 = vld [vmem:[#allocation2 + $0x268] sm:$0xff]
        %v500 = vld [vmem:[#allocation2 + $0x270] sm:$0xff]
        %v501 = vld [vmem:[#allocation2 + $0x278] sm:$0xff]
        %v502 = vld [vmem:[#allocation2 + $0x280] sm:$0xff]
        %v503 = vld [vmem:[#allocation2 + $0x288] sm:$0xff]
        %v504 = vld [vmem:[#allocation2 + $0x290] sm:$0xff]
        %v505 = vld [vmem:[#allocation2 + $0x298] sm:$0xff]
        %v506 = vld [vmem:[#allocation2 + $0x2a0] sm:$0xff]
        %v507 = vld [vmem:[#allocation2 + $0x2a8] sm:$0xff]
        %v508 = vld [vmem:[#allocation2 + $0x2b0] sm:$0xff]
        %v509 = vld [vmem:[#allocation2 + $0x2b8] sm:$0xff]
        %v510 = vld [vmem:[#allocation2 + $0x2c0] sm:$0xff]
        %v511 = vld [vmem:[#allocation2 + $0x2c8] sm:$0xff]
        %v512 = vld [vmem:[#allocation2 + $0x2d0] sm:$0xff]
        %v513 = vld [vmem:[#allocation2 + $0x2d8] sm:$0xff]
        %v514 = vld [vmem:[#allocation2 + $0x2e0] sm:$0xff]
        %v515 = vld [vmem:[#allocation2 + $0x2e8] sm:$0xff]
        %v516 = vld [vmem:[#allocation2 + $0x2f0] sm:$0xff]
        %v517 = vld [vmem:[#allocation2 + $0x2f8] sm:$0xff]
        %v518 = vld [vmem:[%s274] sm:$0xf]
        %v519 = vld [vmem:[%s274 + $0x4] sm:$0xf]
        %v520 = vld [vmem:[%s274 + $0x8] sm:$0xf]
        %v521 = vld [vmem:[%s274 + $0xc] sm:$0xf]
        %v522 = vld [vmem:[%s274 + $0x10] sm:$0xf]
        %v523 = vld [vmem:[%s274 + $0x14] sm:$0xf]
        %v524 = vld [vmem:[%s274 + $0x18] sm:$0xf]
        %v525 = vld [vmem:[%s274 + $0x1c] sm:$0xf]
        %v526 = vld [vmem:[%s274 + $0x20] sm:$0xf]
        %v527 = vld [vmem:[%s274 + $0x24] sm:$0xf]
        %v528 = vld [vmem:[%s274 + $0x28] sm:$0xf]
        %v529 = vld [vmem:[%s274 + $0x2c] sm:$0xf]
        %v530 = vld [vmem:[%s274 + $0x30] sm:$0xf]
        %v531 = vld [vmem:[%s274 + $0x34] sm:$0xf]
        %v532 = vld [vmem:[%s274 + $0x38] sm:$0xf]
        %v533 = vld [vmem:[%s274 + $0x3c] sm:$0xf]
        %v534 = vld [vmem:[%s274 + $0x40] sm:$0xf]
        %v535 = vld [vmem:[%s274 + $0x44] sm:$0xf]
        %v536 = vld [vmem:[%s274 + $0x48] sm:$0xf]
        %v537 = vld [vmem:[%s274 + $0x4c] sm:$0xf]
        %v538 = vld [vmem:[%s274 + $0x50] sm:$0xf]
        %v539 = vld [vmem:[%s274 + $0x54] sm:$0xf]
        %v540 = vld [vmem:[%s274 + $0x58] sm:$0xf]
        %v541 = vld [vmem:[%s274 + $0x5c] sm:$0xf]
        %v542 = vld [vmem:[%s274 + $0x60] sm:$0xf]
        %v543 = vld [vmem:[%s274 + $0x64] sm:$0xf]
        %v544 = vld [vmem:[%s274 + $0x68] sm:$0xf]
        %v545 = vld [vmem:[%s274 + $0x6c] sm:$0xf]
        %v546 = vld [vmem:[%s274 + $0x70] sm:$0xf]
        %v547 = vld [vmem:[%s274 + $0x74] sm:$0xf]
        %v548 = vld [vmem:[%s274 + $0x78] sm:$0xf]
        %v549 = vld [vmem:[%s274 + $0x7c] sm:$0xf]
        %v550 = vld [vmem:[#allocation6] sm:$0xff]
        %v551 = vld [vmem:[#allocation6 + $0x8] sm:$0xf]
        %v552 = vld [vmem:[#allocation6 + $0xc] sm:$0xff]
        %v553 = vld [vmem:[#allocation6 + $0x14] sm:$0xf]
        %v554 = vld [vmem:[#allocation6 + $0x18] sm:$0xff]
        %v555 = vld [vmem:[#allocation6 + $0x20] sm:$0xf]
        %v556 = vld [vmem:[#allocation6 + $0x24] sm:$0xff]
        %v557 = vld [vmem:[#allocation6 + $0x2c] sm:$0xf]
        %v558 = vld [vmem:[#allocation6 + $0x30] sm:$0xff]
        %v559 = vld [vmem:[#allocation6 + $0x38] sm:$0xf]
        %v560 = vld [vmem:[#allocation6 + $0x3c] sm:$0xff]
        %v561 = vld [vmem:[#allocation6 + $0x44] sm:$0xf]
        %v562 = vld [vmem:[#allocation6 + $0x48] sm:$0xff]
        %v563 = vld [vmem:[#allocation6 + $0x50] sm:$0xf]
        %v564 = vld [vmem:[#allocation6 + $0x54] sm:$0xff]
        %v565 = vld [vmem:[#allocation6 + $0x5c] sm:$0xf]
        %v566 = vld [vmem:[#allocation6 + $0x60] sm:$0xff]
        %v567 = vld [vmem:[#allocation6 + $0x68] sm:$0xf]
        %v568 = vld [vmem:[#allocation6 + $0x6c] sm:$0xff]
        %v569 = vld [vmem:[#allocation6 + $0x74] sm:$0xf]
        %v570 = vld [vmem:[#allocation6 + $0x78] sm:$0xff]
        %v571 = vld [vmem:[#allocation6 + $0x80] sm:$0xf]
        %v572 = vld [vmem:[#allocation6 + $0x84] sm:$0xff]
        %v573 = vld [vmem:[#allocation6 + $0x8c] sm:$0xf]
        %v574 = vld [vmem:[#allocation6 + $0x90] sm:$0xff]
        %v575 = vld [vmem:[#allocation6 + $0x98] sm:$0xf]
        %v576 = vld [vmem:[#allocation6 + $0x9c] sm:$0xff]
        %v577 = vld [vmem:[#allocation6 + $0xa4] sm:$0xf]
        %v578 = vld [vmem:[#allocation6 + $0xa8] sm:$0xff]
        %v579 = vld [vmem:[#allocation6 + $0xb0] sm:$0xf]
        %v580 = vld [vmem:[#allocation6 + $0xb4] sm:$0xff]
        %v581 = vld [vmem:[#allocation6 + $0xbc] sm:$0xf]
        %v614 = vunpack.c.l.b16 %v518
        %v615 = vunpack.c.l.b16 %v519
        %v616 = vunpack.c.l.b16 %v520
        %v617 = vunpack.c.l.b16 %v521
        %v618 = vunpack.c.l.b16 %v522
        %v619 = vunpack.c.l.b16 %v523
        %v620 = vunpack.c.l.b16 %v524
        %v621 = vunpack.c.l.b16 %v525
        %v622 = vunpack.c.l.b16 %v526
        %v623 = vunpack.c.l.b16 %v527
        %v624 = vunpack.c.l.b16 %v528
        %v625 = vunpack.c.l.b16 %v529
        %v626 = vunpack.c.l.b16 %v530
        %v627 = vunpack.c.l.b16 %v531
        %v628 = vunpack.c.l.b16 %v532
        %v629 = vunpack.c.l.b16 %v533
        %v630 = vunpack.c.l.b16 %v534
        %v631 = vunpack.c.l.b16 %v535
        %v632 = vunpack.c.l.b16 %v536
        %v633 = vunpack.c.l.b16 %v537
        %v634 = vunpack.c.l.b16 %v538
        %v635 = vunpack.c.l.b16 %v539
        %v636 = vunpack.c.l.b16 %v540
        %v637 = vunpack.c.l.b16 %v541
        %v638 = vunpack.c.l.b16 %v542
        %v639 = vunpack.c.l.b16 %v543
        %v640 = vunpack.c.l.b16 %v544
        %v641 = vunpack.c.l.b16 %v545
        %v642 = vunpack.c.l.b16 %v546
        %v643 = vunpack.c.l.b16 %v547
        %v644 = vunpack.c.l.b16 %v548
        %v645 = vunpack.c.l.b16 %v549
        %v646 = vpack.c.b16 %v615, %v614
        %v647 = vpack.c.b16 %v617, %v616
        %v648 = vpack.c.b16 %v619, %v618
        %v649 = vpack.c.b16 %v621, %v620
        %v650 = vpack.c.b16 %v623, %v622
        %v651 = vpack.c.b16 %v625, %v624
        %v652 = vpack.c.b16 %v627, %v626
        %v653 = vpack.c.b16 %v629, %v628
        %v654 = vpack.c.b16 %v631, %v630
        %v655 = vpack.c.b16 %v633, %v632
        %v656 = vpack.c.b16 %v635, %v634
        %v657 = vpack.c.b16 %v637, %v636
        %v658 = vpack.c.b16 %v639, %v638
        %v659 = vpack.c.b16 %v641, %v640
        %v660 = vpack.c.b16 %v643, %v642
        %v661 = vpack.c.b16 %v645, %v644
        %v710 = vunpack.c.l.b16 %v550
        %v711 = vunpack.c.h.b16 %v550
        %v712 = vunpack.c.l.b16 %v551
        %v713 = vunpack.c.l.b16 %v552
        %v714 = vunpack.c.h.b16 %v552
        %v715 = vunpack.c.l.b16 %v553
        %v716 = vunpack.c.l.b16 %v554
        %v717 = vunpack.c.h.b16 %v554
        %v718 = vunpack.c.l.b16 %v555
        %v719 = vunpack.c.l.b16 %v556
        %v720 = vunpack.c.h.b16 %v556
        %v721 = vunpack.c.l.b16 %v557
        %v722 = vunpack.c.l.b16 %v558
        %v723 = vunpack.c.h.b16 %v558
        %v724 = vunpack.c.l.b16 %v559
        %v725 = vunpack.c.l.b16 %v560
        %v726 = vunpack.c.h.b16 %v560
        %v727 = vunpack.c.l.b16 %v561
        %v728 = vunpack.c.l.b16 %v562
        %v729 = vunpack.c.h.b16 %v562
        %v730 = vunpack.c.l.b16 %v563
        %v731 = vunpack.c.l.b16 %v564
        %v732 = vunpack.c.h.b16 %v564
        %v733 = vunpack.c.l.b16 %v565
        %v734 = vunpack.c.l.b16 %v566
        %v735 = vunpack.c.h.b16 %v566
        %v736 = vunpack.c.l.b16 %v567
        %v737 = vunpack.c.l.b16 %v568
        %v738 = vunpack.c.h.b16 %v568
        %v739 = vunpack.c.l.b16 %v569
        %v740 = vunpack.c.l.b16 %v570
        %v741 = vunpack.c.h.b16 %v570
        %v742 = vunpack.c.l.b16 %v571
        %v743 = vunpack.c.l.b16 %v572
        %v744 = vunpack.c.h.b16 %v572
        %v745 = vunpack.c.l.b16 %v573
        %v746 = vunpack.c.l.b16 %v574
        %v747 = vunpack.c.h.b16 %v574
        %v748 = vunpack.c.l.b16 %v575
        %v749 = vunpack.c.l.b16 %v576
        %v750 = vunpack.c.h.b16 %v576
        %v751 = vunpack.c.l.b16 %v577
        %v752 = vunpack.c.l.b16 %v578
        %v753 = vunpack.c.h.b16 %v578
        %v754 = vunpack.c.l.b16 %v579
        %v755 = vunpack.c.l.b16 %v580
        %v756 = vunpack.c.h.b16 %v580
        %v757 = vunpack.c.l.b16 %v581
        %v758 = vpack.c.b16 %v713, %v710
        %v759 = vpack.c.b16 %v714, %v711
        %v760 = vpack.c.b16 %v715, %v712
        %v761 = vpack.c.b16 %v719, %v716
        %v762 = vpack.c.b16 %v720, %v717
        %v763 = vpack.c.b16 %v721, %v718
        %v764 = vpack.c.b16 %v725, %v722
        %v765 = vpack.c.b16 %v726, %v723
        %v766 = vpack.c.b16 %v727, %v724
        %v767 = vpack.c.b16 %v731, %v728
        %v768 = vpack.c.b16 %v732, %v729
        %v769 = vpack.c.b16 %v733, %v730
        %v770 = vpack.c.b16 %v737, %v734
        %v771 = vpack.c.b16 %v738, %v735
        %v772 = vpack.c.b16 %v739, %v736
        %v773 = vpack.c.b16 %v743, %v740
        %v774 = vpack.c.b16 %v744, %v741
        %v775 = vpack.c.b16 %v745, %v742
        %v776 = vpack.c.b16 %v749, %v746
        %v777 = vpack.c.b16 %v750, %v747
        %v778 = vpack.c.b16 %v751, %v748
        %v779 = vpack.c.b16 %v755, %v752
        %v780 = vpack.c.b16 %v756, %v753
        %v781 = vpack.c.b16 %v757, %v754
        %806 = vmatpush.bf16.msra.mxu0 %v779
        %807 = vmatpush.bf16.msra.mxu0 %v776
        %808 = vmatpush.bf16.msra.mxu0 %v773
        %809 = vmatpush.bf16.msra.mxu0 %v770
        %810 = vmatpush.bf16.msra.mxu0 %v767
        %811 = vmatpush.bf16.msra.mxu0 %v764
        %812 = vmatpush.bf16.msra.mxu0 %v761
        %813 = vmatpush.bf16.msra.mxu0 %v758
        %814 = vmatmul.bf16.gmra.mxu0 %v646
        %v815 = vpop.f32.mrf.mxu0
        %v816 = vadd.f32 0.0, %v815
        %v817 = vpop.f32.mrf.mxu0
        %v818 = vadd.f32 0.0, %v817
        %819 = vmatmul.bf16.gmra.mxu0 %v647
        %v820 = vpop.f32.mrf.mxu0
        %v821 = vadd.f32 0.0, %v820
        %v822 = vpop.f32.mrf.mxu0
        %v823 = vadd.f32 0.0, %v822
        %824 = vmatmul.bf16.gmra.mxu0 %v648
        %v825 = vpop.f32.mrf.mxu0
        %v826 = vadd.f32 0.0, %v825
        %v827 = vpop.f32.mrf.mxu0
        %v828 = vadd.f32 0.0, %v827
        %829 = vmatmul.bf16.gmra.mxu0 %v649
        %v830 = vpop.f32.mrf.mxu0
        %v831 = vadd.f32 0.0, %v830
        %v832 = vpop.f32.mrf.mxu0
        %v833 = vadd.f32 0.0, %v832
        %834 = vmatmul.bf16.gmra.mxu0 %v650
        %v835 = vpop.f32.mrf.mxu0
        %v836 = vadd.f32 0.0, %v835
        %v837 = vpop.f32.mrf.mxu0
        %v838 = vadd.f32 0.0, %v837
        %839 = vmatmul.bf16.gmra.mxu0 %v651
        %v840 = vpop.f32.mrf.mxu0
        %v841 = vadd.f32 0.0, %v840
        %v842 = vpop.f32.mrf.mxu0
        %v843 = vadd.f32 0.0, %v842
        %844 = vmatmul.bf16.gmra.mxu0 %v652
        %v845 = vpop.f32.mrf.mxu0
        %v846 = vadd.f32 0.0, %v845
        %v847 = vpop.f32.mrf.mxu0
        %v848 = vadd.f32 0.0, %v847
        %849 = vmatmul.bf16.gmra.mxu0 %v653
        %v850 = vpop.f32.mrf.mxu0
        %v851 = vadd.f32 0.0, %v850
        %v852 = vpop.f32.mrf.mxu0
        %v853 = vadd.f32 0.0, %v852
        %854 = vmatmul.bf16.gmra.mxu0 %v654
        %v855 = vpop.f32.mrf.mxu0
        %v856 = vadd.f32 0.0, %v855
        %v857 = vpop.f32.mrf.mxu0
        %v858 = vadd.f32 0.0, %v857
        %859 = vmatmul.bf16.gmra.mxu0 %v655
        %v860 = vpop.f32.mrf.mxu0
        %v861 = vadd.f32 0.0, %v860
        %v862 = vpop.f32.mrf.mxu0
        %v863 = vadd.f32 0.0, %v862
        %864 = vmatmul.bf16.gmra.mxu0 %v656
        %v865 = vpop.f32.mrf.mxu0
        %v866 = vadd.f32 0.0, %v865
        %v867 = vpop.f32.mrf.mxu0
        %v868 = vadd.f32 0.0, %v867
        %869 = vmatmul.bf16.gmra.mxu0 %v657
        %v870 = vpop.f32.mrf.mxu0
        %v871 = vadd.f32 0.0, %v870
        %v872 = vpop.f32.mrf.mxu0
        %v873 = vadd.f32 0.0, %v872
        %874 = vmatmul.bf16.gmra.mxu0 %v658
        %v875 = vpop.f32.mrf.mxu0
        %v876 = vadd.f32 0.0, %v875
        %v877 = vpop.f32.mrf.mxu0
        %v878 = vadd.f32 0.0, %v877
        %879 = vmatmul.bf16.gmra.mxu0 %v659
        %v880 = vpop.f32.mrf.mxu0
        %v881 = vadd.f32 0.0, %v880
        %v882 = vpop.f32.mrf.mxu0
        %v883 = vadd.f32 0.0, %v882
        %884 = vmatmul.bf16.gmra.mxu0 %v660
        %v885 = vpop.f32.mrf.mxu0
        %v886 = vadd.f32 0.0, %v885
        %v887 = vpop.f32.mrf.mxu0
        %v888 = vadd.f32 0.0, %v887
        %889 = vmatmul.bf16.gmra.mxu0 %v661
        %v890 = vpop.f32.mrf.mxu0
        %v891 = vadd.f32 0.0, %v890
        %v892 = vpop.f32.mrf.mxu0
        %v893 = vadd.f32 0.0, %v892
        %894 = vdwg.mxu0
        %895 = vmatpush.bf16.msra.mxu0 %v780
        %896 = vmatpush.bf16.msra.mxu0 %v777
        %897 = vmatpush.bf16.msra.mxu0 %v774
        %898 = vmatpush.bf16.msra.mxu0 %v771
        %899 = vmatpush.bf16.msra.mxu0 %v768
        %900 = vmatpush.bf16.msra.mxu0 %v765
        %901 = vmatpush.bf16.msra.mxu0 %v762
        %902 = vmatpush.bf16.msra.mxu0 %v759
        %903 = vmatmul.bf16.gmra.mxu0 %v646
        %v904 = vpop.f32.mrf.mxu0
        %v905 = vadd.f32 0.0, %v904
        %v906 = vpop.f32.mrf.mxu0
        %v907 = vadd.f32 0.0, %v906
        %908 = vmatmul.bf16.gmra.mxu0 %v647
        %v909 = vpop.f32.mrf.mxu0
        %v910 = vadd.f32 0.0, %v909
        %v911 = vpop.f32.mrf.mxu0
        %v912 = vadd.f32 0.0, %v911
        %913 = vmatmul.bf16.gmra.mxu0 %v648
        %v914 = vpop.f32.mrf.mxu0
        %v915 = vadd.f32 0.0, %v914
        %v916 = vpop.f32.mrf.mxu0
        %v917 = vadd.f32 0.0, %v916
        %918 = vmatmul.bf16.gmra.mxu0 %v649
        %v919 = vpop.f32.mrf.mxu0
        %v920 = vadd.f32 0.0, %v919
        %v921 = vpop.f32.mrf.mxu0
        %v922 = vadd.f32 0.0, %v921
        %923 = vmatmul.bf16.gmra.mxu0 %v650
        %v924 = vpop.f32.mrf.mxu0
        %v925 = vadd.f32 0.0, %v924
        %v926 = vpop.f32.mrf.mxu0
        %v927 = vadd.f32 0.0, %v926
        %928 = vmatmul.bf16.gmra.mxu0 %v651
        %v929 = vpop.f32.mrf.mxu0
        %v930 = vadd.f32 0.0, %v929
        %v931 = vpop.f32.mrf.mxu0
        %v932 = vadd.f32 0.0, %v931
        %933 = vmatmul.bf16.gmra.mxu0 %v652
        %v934 = vpop.f32.mrf.mxu0
        %v935 = vadd.f32 0.0, %v934
        %v936 = vpop.f32.mrf.mxu0
        %v937 = vadd.f32 0.0, %v936
        %938 = vmatmul.bf16.gmra.mxu0 %v653
        %v939 = vpop.f32.mrf.mxu0
        %v940 = vadd.f32 0.0, %v939
        %v941 = vpop.f32.mrf.mxu0
        %v942 = vadd.f32 0.0, %v941
        %943 = vmatmul.bf16.gmra.mxu0 %v654
        %v944 = vpop.f32.mrf.mxu0
        %v945 = vadd.f32 0.0, %v944
        %v946 = vpop.f32.mrf.mxu0
        %v947 = vadd.f32 0.0, %v946
        %948 = vmatmul.bf16.gmra.mxu0 %v655
        %v949 = vpop.f32.mrf.mxu0
        %v950 = vadd.f32 0.0, %v949
        %v951 = vpop.f32.mrf.mxu0
        %v952 = vadd.f32 0.0, %v951
        %953 = vmatmul.bf16.gmra.mxu0 %v656
        %v954 = vpop.f32.mrf.mxu0
        %v955 = vadd.f32 0.0, %v954
        %v956 = vpop.f32.mrf.mxu0
        %v957 = vadd.f32 0.0, %v956
        %958 = vmatmul.bf16.gmra.mxu0 %v657
        %v959 = vpop.f32.mrf.mxu0
        %v960 = vadd.f32 0.0, %v959
        %v961 = vpop.f32.mrf.mxu0
        %v962 = vadd.f32 0.0, %v961
        %963 = vmatmul.bf16.gmra.mxu0 %v658
        %v964 = vpop.f32.mrf.mxu0
        %v965 = vadd.f32 0.0, %v964
        %v966 = vpop.f32.mrf.mxu0
        %v967 = vadd.f32 0.0, %v966
        %968 = vmatmul.bf16.gmra.mxu0 %v659
        %v969 = vpop.f32.mrf.mxu0
        %v970 = vadd.f32 0.0, %v969
        %v971 = vpop.f32.mrf.mxu0
        %v972 = vadd.f32 0.0, %v971
        %973 = vmatmul.bf16.gmra.mxu0 %v660
        %v974 = vpop.f32.mrf.mxu0
        %v975 = vadd.f32 0.0, %v974
        %v976 = vpop.f32.mrf.mxu0
        %v977 = vadd.f32 0.0, %v976
        %978 = vmatmul.bf16.gmra.mxu0 %v661
        %v979 = vpop.f32.mrf.mxu0
        %v980 = vadd.f32 0.0, %v979
        %v981 = vpop.f32.mrf.mxu0
        %v982 = vadd.f32 0.0, %v981
        %983 = vdwg.mxu0
        %984 = vmatpush.bf16.msra.mxu0 %v781
        %985 = vmatpush.bf16.msra.mxu0 %v778
        %986 = vmatpush.bf16.msra.mxu0 %v775
        %987 = vmatpush.bf16.msra.mxu0 %v772
        %988 = vmatpush.bf16.msra.mxu0 %v769
        %989 = vmatpush.bf16.msra.mxu0 %v766
        %990 = vmatpush.bf16.msra.mxu0 %v763
        %991 = vmatpush.bf16.msra.mxu0 %v760
        %992 = vmatmul.bf16.gmra.mxu0 %v646
        %v993 = vpop.f32.mrf.mxu0
        %v994 = vadd.f32 0.0, %v993
        %v995 = vpop.f32.mrf.mxu0
        %v996 = vadd.f32 0.0, %v995
        %997 = vmatmul.bf16.gmra.mxu0 %v647
        %v998 = vpop.f32.mrf.mxu0
        %v999 = vadd.f32 0.0, %v998
        %v1000 = vpop.f32.mrf.mxu0
        %v1001 = vadd.f32 0.0, %v1000
        %1002 = vmatmul.bf16.gmra.mxu0 %v648
        %v1003 = vpop.f32.mrf.mxu0
        %v1004 = vadd.f32 0.0, %v1003
        %v1005 = vpop.f32.mrf.mxu0
        %v1006 = vadd.f32 0.0, %v1005
        %1007 = vmatmul.bf16.gmra.mxu0 %v649
        %v1008 = vpop.f32.mrf.mxu0
        %v1009 = vadd.f32 0.0, %v1008
        %v1010 = vpop.f32.mrf.mxu0
        %v1011 = vadd.f32 0.0, %v1010
        %1012 = vmatmul.bf16.gmra.mxu0 %v650
        %v1013 = vpop.f32.mrf.mxu0
        %v1014 = vadd.f32 0.0, %v1013
        %v1015 = vpop.f32.mrf.mxu0
        %v1016 = vadd.f32 0.0, %v1015
        %1017 = vmatmul.bf16.gmra.mxu0 %v651
        %v1018 = vpop.f32.mrf.mxu0
        %v1019 = vadd.f32 0.0, %v1018
        %v1020 = vpop.f32.mrf.mxu0
        %v1021 = vadd.f32 0.0, %v1020
        %1022 = vmatmul.bf16.gmra.mxu0 %v652
        %v1023 = vpop.f32.mrf.mxu0
        %v1024 = vadd.f32 0.0, %v1023
        %v1025 = vpop.f32.mrf.mxu0
        %v1026 = vadd.f32 0.0, %v1025
        %1027 = vmatmul.bf16.gmra.mxu0 %v653
        %v1028 = vpop.f32.mrf.mxu0
        %v1029 = vadd.f32 0.0, %v1028
        %v1030 = vpop.f32.mrf.mxu0
        %v1031 = vadd.f32 0.0, %v1030
        %1032 = vmatmul.bf16.gmra.mxu0 %v654
        %v1033 = vpop.f32.mrf.mxu0
        %v1034 = vadd.f32 0.0, %v1033
        %v1035 = vpop.f32.mrf.mxu0
        %v1036 = vadd.f32 0.0, %v1035
        %1037 = vmatmul.bf16.gmra.mxu0 %v655
        %v1038 = vpop.f32.mrf.mxu0
        %v1039 = vadd.f32 0.0, %v1038
        %v1040 = vpop.f32.mrf.mxu0
        %v1041 = vadd.f32 0.0, %v1040
        %1042 = vmatmul.bf16.gmra.mxu0 %v656
        %v1043 = vpop.f32.mrf.mxu0
        %v1044 = vadd.f32 0.0, %v1043
        %v1045 = vpop.f32.mrf.mxu0
        %v1046 = vadd.f32 0.0, %v1045
        %1047 = vmatmul.bf16.gmra.mxu0 %v657
        %v1048 = vpop.f32.mrf.mxu0
        %v1049 = vadd.f32 0.0, %v1048
        %v1050 = vpop.f32.mrf.mxu0
        %v1051 = vadd.f32 0.0, %v1050
        %1052 = vmatmul.bf16.gmra.mxu0 %v658
        %v1053 = vpop.f32.mrf.mxu0
        %v1054 = vadd.f32 0.0, %v1053
        %v1055 = vpop.f32.mrf.mxu0
        %v1056 = vadd.f32 0.0, %v1055
        %1057 = vmatmul.bf16.gmra.mxu0 %v659
        %v1058 = vpop.f32.mrf.mxu0
        %v1059 = vadd.f32 0.0, %v1058
        %v1060 = vpop.f32.mrf.mxu0
        %v1061 = vadd.f32 0.0, %v1060
        %1062 = vmatmul.bf16.gmra.mxu0 %v660
        %v1063 = vpop.f32.mrf.mxu0
        %v1064 = vadd.f32 0.0, %v1063
        %v1065 = vpop.f32.mrf.mxu0
        %v1066 = vadd.f32 0.0, %v1065
        %1067 = vmatmul.bf16.gmra.mxu0 %v661
        %v1068 = vpop.f32.mrf.mxu0
        %v1069 = vadd.f32 0.0, %v1068
        %v1070 = vpop.f32.mrf.mxu0
        %v1071 = vadd.f32 0.0, %v1070
        %1072 = vdwg.mxu0
        %v1073 = vadd.f32 %v422, %v816
        %v1074 = vadd.f32 %v423, %v905
        %v1075 = vadd.f32 %v424, %v994
        %v1076 = vadd.f32 %v425, %v818
        %v1077 = vadd.f32 %v426, %v907
        %v1078 = vadd.f32 %v427, %v996
        %v1079 = vadd.f32 %v428, %v821
        %v1080 = vadd.f32 %v429, %v910
        %v1081 = vadd.f32 %v430, %v999
        %v1082 = vadd.f32 %v431, %v823
        %v1083 = vadd.f32 %v432, %v912
        %v1084 = vadd.f32 %v433, %v1001
        %v1085 = vadd.f32 %v434, %v826
        %v1086 = vadd.f32 %v435, %v915
        %v1087 = vadd.f32 %v436, %v1004
        %v1088 = vadd.f32 %v437, %v828
        %v1089 = vadd.f32 %v438, %v917
        %v1090 = vadd.f32 %v439, %v1006
        %v1091 = vadd.f32 %v440, %v831
        %v1092 = vadd.f32 %v441, %v920
        %v1093 = vadd.f32 %v442, %v1009
        %v1094 = vadd.f32 %v443, %v833
        %v1095 = vadd.f32 %v444, %v922
        %v1096 = vadd.f32 %v445, %v1011
        %v1097 = vadd.f32 %v446, %v836
        %v1098 = vadd.f32 %v447, %v925
        %v1099 = vadd.f32 %v448, %v1014
        %v1100 = vadd.f32 %v449, %v838
        %v1101 = vadd.f32 %v450, %v927
        %v1102 = vadd.f32 %v451, %v1016
        %v1103 = vadd.f32 %v452, %v841
        %v1104 = vadd.f32 %v453, %v930
        %v1105 = vadd.f32 %v454, %v1019
        %v1106 = vadd.f32 %v455, %v843
        %v1107 = vadd.f32 %v456, %v932
        %v1108 = vadd.f32 %v457, %v1021
        %v1109 = vadd.f32 %v458, %v846
        %v1110 = vadd.f32 %v459, %v935
        %v1111 = vadd.f32 %v460, %v1024
        %v1112 = vadd.f32 %v461, %v848
        %v1113 = vadd.f32 %v462, %v937
        %v1114 = vadd.f32 %v463, %v1026
        %v1115 = vadd.f32 %v464, %v851
        %v1116 = vadd.f32 %v465, %v940
        %v1117 = vadd.f32 %v466, %v1029
        %v1118 = vadd.f32 %v467, %v853
        %v1119 = vadd.f32 %v468, %v942
        %v1120 = vadd.f32 %v469, %v1031
        %v1121 = vadd.f32 %v470, %v856
        %v1122 = vadd.f32 %v471, %v945
        %v1123 = vadd.f32 %v472, %v1034
        %v1124 = vadd.f32 %v473, %v858
        %v1125 = vadd.f32 %v474, %v947
        %v1126 = vadd.f32 %v475, %v1036
        %v1127 = vadd.f32 %v476, %v861
        %v1128 = vadd.f32 %v477, %v950
        %v1129 = vadd.f32 %v478, %v1039
        %v1130 = vadd.f32 %v479, %v863
        %v1131 = vadd.f32 %v480, %v952
        %v1132 = vadd.f32 %v481, %v1041
        %v1133 = vadd.f32 %v482, %v866
        %v1134 = vadd.f32 %v483, %v955
        %v1135 = vadd.f32 %v484, %v1044
        %v1136 = vadd.f32 %v485, %v868
        %v1137 = vadd.f32 %v486, %v957
        %v1138 = vadd.f32 %v487, %v1046
        %v1139 = vadd.f32 %v488, %v871
        %v1140 = vadd.f32 %v489, %v960
        %v1141 = vadd.f32 %v490, %v1049
        %v1142 = vadd.f32 %v491, %v873
        %v1143 = vadd.f32 %v492, %v962
        %v1144 = vadd.f32 %v493, %v1051
        %v1145 = vadd.f32 %v494, %v876
        %v1146 = vadd.f32 %v495, %v965
        %v1147 = vadd.f32 %v496, %v1054
        %v1148 = vadd.f32 %v497, %v878
        %v1149 = vadd.f32 %v498, %v967
        %v1150 = vadd.f32 %v499, %v1056
        %v1151 = vadd.f32 %v500, %v881
        %v1152 = vadd.f32 %v501, %v970
        %v1153 = vadd.f32 %v502, %v1059
        %v1154 = vadd.f32 %v503, %v883
        %v1155 = vadd.f32 %v504, %v972
        %v1156 = vadd.f32 %v505, %v1061
        %v1157 = vadd.f32 %v506, %v886
        %v1158 = vadd.f32 %v507, %v975
        %v1159 = vadd.f32 %v508, %v1064
        %v1160 = vadd.f32 %v509, %v888
        %v1161 = vadd.f32 %v510, %v977
        %v1162 = vadd.f32 %v511, %v1066
        %v1163 = vadd.f32 %v512, %v891
        %v1164 = vadd.f32 %v513, %v980
        %v1165 = vadd.f32 %v514, %v1069
        %v1166 = vadd.f32 %v515, %v893
        %v1167 = vadd.f32 %v516, %v982
        %v1168 = vadd.f32 %v517, %v1071
        %1169 = vst [vmem:[#allocation2] sm:$0xff] %v1073
        %1170 = vst [vmem:[#allocation2 + $0x8] sm:$0xff] %v1074
        %1171 = vst [vmem:[#allocation2 + $0x10] sm:$0xff] %v1075
        %1172 = vst [vmem:[#allocation2 + $0x18] sm:$0xff] %v1076
        %1173 = vst [vmem:[#allocation2 + $0x20] sm:$0xff] %v1077
        %1174 = vst [vmem:[#allocation2 + $0x28] sm:$0xff] %v1078
        %1175 = vst [vmem:[#allocation2 + $0x30] sm:$0xff] %v1079
        %1176 = vst [vmem:[#allocation2 + $0x38] sm:$0xff] %v1080
        %1177 = vst [vmem:[#allocation2 + $0x40] sm:$0xff] %v1081
        %1178 = vst [vmem:[#allocation2 + $0x48] sm:$0xff] %v1082
        %1179 = vst [vmem:[#allocation2 + $0x50] sm:$0xff] %v1083
        %1180 = vst [vmem:[#allocation2 + $0x58] sm:$0xff] %v1084
        %1181 = vst [vmem:[#allocation2 + $0x60] sm:$0xff] %v1085
        %1182 = vst [vmem:[#allocation2 + $0x68] sm:$0xff] %v1086
        %1183 = vst [vmem:[#allocation2 + $0x70] sm:$0xff] %v1087
        %1184 = vst [vmem:[#allocation2 + $0x78] sm:$0xff] %v1088
        %1185 = vst [vmem:[#allocation2 + $0x80] sm:$0xff] %v1089
        %1186 = vst [vmem:[#allocation2 + $0x88] sm:$0xff] %v1090
        %1187 = vst [vmem:[#allocation2 + $0x90] sm:$0xff] %v1091
        %1188 = vst [vmem:[#allocation2 + $0x98] sm:$0xff] %v1092
        %1189 = vst [vmem:[#allocation2 + $0xa0] sm:$0xff] %v1093
        %1190 = vst [vmem:[#allocation2 + $0xa8] sm:$0xff] %v1094
        %1191 = vst [vmem:[#allocation2 + $0xb0] sm:$0xff] %v1095
        %1192 = vst [vmem:[#allocation2 + $0xb8] sm:$0xff] %v1096
        %1193 = vst [vmem:[#allocation2 + $0xc0] sm:$0xff] %v1097
        %1194 = vst [vmem:[#allocation2 + $0xc8] sm:$0xff] %v1098
        %1195 = vst [vmem:[#allocation2 + $0xd0] sm:$0xff] %v1099
        %1196 = vst [vmem:[#allocation2 + $0xd8] sm:$0xff] %v1100
        %1197 = vst [vmem:[#allocation2 + $0xe0] sm:$0xff] %v1101
        %1198 = vst [vmem:[#allocation2 + $0xe8] sm:$0xff] %v1102
        %1199 = vst [vmem:[#allocation2 + $0xf0] sm:$0xff] %v1103
        %1200 = vst [vmem:[#allocation2 + $0xf8] sm:$0xff] %v1104
        %1201 = vst [vmem:[#allocation2 + $0x100] sm:$0xff] %v1105
        %1202 = vst [vmem:[#allocation2 + $0x108] sm:$0xff] %v1106
        %1203 = vst [vmem:[#allocation2 + $0x110] sm:$0xff] %v1107
        %1204 = vst [vmem:[#allocation2 + $0x118] sm:$0xff] %v1108
        %1205 = vst [vmem:[#allocation2 + $0x120] sm:$0xff] %v1109
        %1206 = vst [vmem:[#allocation2 + $0x128] sm:$0xff] %v1110
        %1207 = vst [vmem:[#allocation2 + $0x130] sm:$0xff] %v1111
        %1208 = vst [vmem:[#allocation2 + $0x138] sm:$0xff] %v1112
        %1209 = vst [vmem:[#allocation2 + $0x140] sm:$0xff] %v1113
        %1210 = vst [vmem:[#allocation2 + $0x148] sm:$0xff] %v1114
        %1211 = vst [vmem:[#allocation2 + $0x150] sm:$0xff] %v1115
        %1212 = vst [vmem:[#allocation2 + $0x158] sm:$0xff] %v1116
        %1213 = vst [vmem:[#allocation2 + $0x160] sm:$0xff] %v1117
        %1214 = vst [vmem:[#allocation2 + $0x168] sm:$0xff] %v1118
        %1215 = vst [vmem:[#allocation2 + $0x170] sm:$0xff] %v1119
        %1216 = vst [vmem:[#allocation2 + $0x178] sm:$0xff] %v1120
        %1217 = vst [vmem:[#allocation2 + $0x180] sm:$0xff] %v1121
        %1218 = vst [vmem:[#allocation2 + $0x188] sm:$0xff] %v1122
        %1219 = vst [vmem:[#allocation2 + $0x190] sm:$0xff] %v1123
        %1220 = vst [vmem:[#allocation2 + $0x198] sm:$0xff] %v1124
        %1221 = vst [vmem:[#allocation2 + $0x1a0] sm:$0xff] %v1125
        %1222 = vst [vmem:[#allocation2 + $0x1a8] sm:$0xff] %v1126
        %1223 = vst [vmem:[#allocation2 + $0x1b0] sm:$0xff] %v1127
        %1224 = vst [vmem:[#allocation2 + $0x1b8] sm:$0xff] %v1128
        %1225 = vst [vmem:[#allocation2 + $0x1c0] sm:$0xff] %v1129
        %1226 = vst [vmem:[#allocation2 + $0x1c8] sm:$0xff] %v1130
        %1227 = vst [vmem:[#allocation2 + $0x1d0] sm:$0xff] %v1131
        %1228 = vst [vmem:[#allocation2 + $0x1d8] sm:$0xff] %v1132
        %1229 = vst [vmem:[#allocation2 + $0x1e0] sm:$0xff] %v1133
        %1230 = vst [vmem:[#allocation2 + $0x1e8] sm:$0xff] %v1134
        %1231 = vst [vmem:[#allocation2 + $0x1f0] sm:$0xff] %v1135
        %1232 = vst [vmem:[#allocation2 + $0x1f8] sm:$0xff] %v1136
        %1233 = vst [vmem:[#allocation2 + $0x200] sm:$0xff] %v1137
        %1234 = vst [vmem:[#allocation2 + $0x208] sm:$0xff] %v1138
        %1235 = vst [vmem:[#allocation2 + $0x210] sm:$0xff] %v1139
        %1236 = vst [vmem:[#allocation2 + $0x218] sm:$0xff] %v1140
        %1237 = vst [vmem:[#allocation2 + $0x220] sm:$0xff] %v1141
        %1238 = vst [vmem:[#allocation2 + $0x228] sm:$0xff] %v1142
        %1239 = vst [vmem:[#allocation2 + $0x230] sm:$0xff] %v1143
        %1240 = vst [vmem:[#allocation2 + $0x238] sm:$0xff] %v1144
        %1241 = vst [vmem:[#allocation2 + $0x240] sm:$0xff] %v1145
        %1242 = vst [vmem:[#allocation2 + $0x248] sm:$0xff] %v1146
        %1243 = vst [vmem:[#allocation2 + $0x250] sm:$0xff] %v1147
        %1244 = vst [vmem:[#allocation2 + $0x258] sm:$0xff] %v1148
        %1245 = vst [vmem:[#allocation2 + $0x260] sm:$0xff] %v1149
        %1246 = vst [vmem:[#allocation2 + $0x268] sm:$0xff] %v1150
        %1247 = vst [vmem:[#allocation2 + $0x270] sm:$0xff] %v1151
        %1248 = vst [vmem:[#allocation2 + $0x278] sm:$0xff] %v1152
        %1249 = vst [vmem:[#allocation2 + $0x280] sm:$0xff] %v1153
        %1250 = vst [vmem:[#allocation2 + $0x288] sm:$0xff] %v1154
        %1251 = vst [vmem:[#allocation2 + $0x290] sm:$0xff] %v1155
        %1252 = vst [vmem:[#allocation2 + $0x298] sm:$0xff] %v1156
        %1253 = vst [vmem:[#allocation2 + $0x2a0] sm:$0xff] %v1157
        %1254 = vst [vmem:[#allocation2 + $0x2a8] sm:$0xff] %v1158
        %1255 = vst [vmem:[#allocation2 + $0x2b0] sm:$0xff] %v1159
        %1256 = vst [vmem:[#allocation2 + $0x2b8] sm:$0xff] %v1160
        %1257 = vst [vmem:[#allocation2 + $0x2c0] sm:$0xff] %v1161
        %1258 = vst [vmem:[#allocation2 + $0x2c8] sm:$0xff] %v1162
        %1259 = vst [vmem:[#allocation2 + $0x2d0] sm:$0xff] %v1163
        %1260 = vst [vmem:[#allocation2 + $0x2d8] sm:$0xff] %v1164
        %1261 = vst [vmem:[#allocation2 + $0x2e0] sm:$0xff] %v1165
        %1262 = vst [vmem:[#allocation2 + $0x2e8] sm:$0xff] %v1166
        %1263 = vst [vmem:[#allocation2 + $0x2f0] sm:$0xff] %v1167
        %1264 = vst [vmem:[#allocation2 + $0x2f8] sm:$0xff] %v1168
        // Predicated region
        $region57: #{tpu_custom_call.1} parent=35 // pred_check
          %p1265 = pneg %p322
        $region58: #{tpu_custom_call.1} parent=35 // pred_check_branch
          %1267 = sbr.rel (%p1265) target = $region60
        $region59: #{tpu_custom_call.1} parent=35 // pred_region
          %v1268 = vld [vmem:[#allocation2] sm:$0xff]
          %v1269 = vld [vmem:[#allocation2 + $0x8] sm:$0xff]
          %v1270 = vld [vmem:[#allocation2 + $0x10] sm:$0xff]
          %v1271 = vld [vmem:[#allocation2 + $0x18] sm:$0xff]
          %v1272 = vld [vmem:[#allocation2 + $0x20] sm:$0xff]
          %v1273 = vld [vmem:[#allocation2 + $0x28] sm:$0xff]
          %v1274 = vld [vmem:[#allocation2 + $0x30] sm:$0xff]
          %v1275 = vld [vmem:[#allocation2 + $0x38] sm:$0xff]
          %v1276 = vld [vmem:[#allocation2 + $0x40] sm:$0xff]
          %v1277 = vld [vmem:[#allocation2 + $0x48] sm:$0xff]
          %v1278 = vld [vmem:[#allocation2 + $0x50] sm:$0xff]
          %v1279 = vld [vmem:[#allocation2 + $0x58] sm:$0xff]
          %v1280 = vld [vmem:[#allocation2 + $0x60] sm:$0xff]
          %v1281 = vld [vmem:[#allocation2 + $0x68] sm:$0xff]
          %v1282 = vld [vmem:[#allocation2 + $0x70] sm:$0xff]
          %v1283 = vld [vmem:[#allocation2 + $0x78] sm:$0xff]
          %v1284 = vld [vmem:[#allocation2 + $0x80] sm:$0xff]
          %v1285 = vld [vmem:[#allocation2 + $0x88] sm:$0xff]
          %v1286 = vld [vmem:[#allocation2 + $0x90] sm:$0xff]
          %v1287 = vld [vmem:[#allocation2 + $0x98] sm:$0xff]
          %v1288 = vld [vmem:[#allocation2 + $0xa0] sm:$0xff]
          %v1289 = vld [vmem:[#allocation2 + $0xa8] sm:$0xff]
          %v1290 = vld [vmem:[#allocation2 + $0xb0] sm:$0xff]
          %v1291 = vld [vmem:[#allocation2 + $0xb8] sm:$0xff]
          %v1292 = vld [vmem:[#allocation2 + $0xc0] sm:$0xff]
          %v1293 = vld [vmem:[#allocation2 + $0xc8] sm:$0xff]
          %v1294 = vld [vmem:[#allocation2 + $0xd0] sm:$0xff]
          %v1295 = vld [vmem:[#allocation2 + $0xd8] sm:$0xff]
          %v1296 = vld [vmem:[#allocation2 + $0xe0] sm:$0xff]
          %v1297 = vld [vmem:[#allocation2 + $0xe8] sm:$0xff]
          %v1298 = vld [vmem:[#allocation2 + $0xf0] sm:$0xff]
          %v1299 = vld [vmem:[#allocation2 + $0xf8] sm:$0xff]
          %v1300 = vld [vmem:[#allocation2 + $0x100] sm:$0xff]
          %v1301 = vld [vmem:[#allocation2 + $0x108] sm:$0xff]
          %v1302 = vld [vmem:[#allocation2 + $0x110] sm:$0xff]
          %v1303 = vld [vmem:[#allocation2 + $0x118] sm:$0xff]
          %v1304 = vld [vmem:[#allocation2 + $0x120] sm:$0xff]
          %v1305 = vld [vmem:[#allocation2 + $0x128] sm:$0xff]
          %v1306 = vld [vmem:[#allocation2 + $0x130] sm:$0xff]
          %v1307 = vld [vmem:[#allocation2 + $0x138] sm:$0xff]
          %v1308 = vld [vmem:[#allocation2 + $0x140] sm:$0xff]
          %v1309 = vld [vmem:[#allocation2 + $0x148] sm:$0xff]
          %v1310 = vld [vmem:[#allocation2 + $0x150] sm:$0xff]
          %v1311 = vld [vmem:[#allocation2 + $0x158] sm:$0xff]
          %v1312 = vld [vmem:[#allocation2 + $0x160] sm:$0xff]
          %v1313 = vld [vmem:[#allocation2 + $0x168] sm:$0xff]
          %v1314 = vld [vmem:[#allocation2 + $0x170] sm:$0xff]
          %v1315 = vld [vmem:[#allocation2 + $0x178] sm:$0xff]
          %v1316 = vld [vmem:[#allocation2 + $0x180] sm:$0xff]
          %v1317 = vld [vmem:[#allocation2 + $0x188] sm:$0xff]
          %v1318 = vld [vmem:[#allocation2 + $0x190] sm:$0xff]
          %v1319 = vld [vmem:[#allocation2 + $0x198] sm:$0xff]
          %v1320 = vld [vmem:[#allocation2 + $0x1a0] sm:$0xff]
          %v1321 = vld [vmem:[#allocation2 + $0x1a8] sm:$0xff]
          %v1322 = vld [vmem:[#allocation2 + $0x1b0] sm:$0xff]
          %v1323 = vld [vmem:[#allocation2 + $0x1b8] sm:$0xff]
          %v1324 = vld [vmem:[#allocation2 + $0x1c0] sm:$0xff]
          %v1325 = vld [vmem:[#allocation2 + $0x1c8] sm:$0xff]
          %v1326 = vld [vmem:[#allocation2 + $0x1d0] sm:$0xff]
          %v1327 = vld [vmem:[#allocation2 + $0x1d8] sm:$0xff]
          %v1328 = vld [vmem:[#allocation2 + $0x1e0] sm:$0xff]
          %v1329 = vld [vmem:[#allocation2 + $0x1e8] sm:$0xff]
          %v1330 = vld [vmem:[#allocation2 + $0x1f0] sm:$0xff]
          %v1331 = vld [vmem:[#allocation2 + $0x1f8] sm:$0xff]
          %v1332 = vld [vmem:[#allocation2 + $0x200] sm:$0xff]
          %v1333 = vld [vmem:[#allocation2 + $0x208] sm:$0xff]
          %v1334 = vld [vmem:[#allocation2 + $0x210] sm:$0xff]
          %v1335 = vld [vmem:[#allocation2 + $0x218] sm:$0xff]
          %v1336 = vld [vmem:[#allocation2 + $0x220] sm:$0xff]
          %v1337 = vld [vmem:[#allocation2 + $0x228] sm:$0xff]
          %v1338 = vld [vmem:[#allocation2 + $0x230] sm:$0xff]
          %v1339 = vld [vmem:[#allocation2 + $0x238] sm:$0xff]
          %v1340 = vld [vmem:[#allocation2 + $0x240] sm:$0xff]
          %v1341 = vld [vmem:[#allocation2 + $0x248] sm:$0xff]
          %v1342 = vld [vmem:[#allocation2 + $0x250] sm:$0xff]
          %v1343 = vld [vmem:[#allocation2 + $0x258] sm:$0xff]
          %v1344 = vld [vmem:[#allocation2 + $0x260] sm:$0xff]
          %v1345 = vld [vmem:[#allocation2 + $0x268] sm:$0xff]
          %v1346 = vld [vmem:[#allocation2 + $0x270] sm:$0xff]
          %v1347 = vld [vmem:[#allocation2 + $0x278] sm:$0xff]
          %v1348 = vld [vmem:[#allocation2 + $0x280] sm:$0xff]
          %v1349 = vld [vmem:[#allocation2 + $0x288] sm:$0xff]
          %v1350 = vld [vmem:[#allocation2 + $0x290] sm:$0xff]
          %v1351 = vld [vmem:[#allocation2 + $0x298] sm:$0xff]
          %v1352 = vld [vmem:[#allocation2 + $0x2a0] sm:$0xff]
          %v1353 = vld [vmem:[#allocation2 + $0x2a8] sm:$0xff]
          %v1354 = vld [vmem:[#allocation2 + $0x2b0] sm:$0xff]
          %v1355 = vld [vmem:[#allocation2 + $0x2b8] sm:$0xff]
          %v1356 = vld [vmem:[#allocation2 + $0x2c0] sm:$0xff]
          %v1357 = vld [vmem:[#allocation2 + $0x2c8] sm:$0xff]
          %v1358 = vld [vmem:[#allocation2 + $0x2d0] sm:$0xff]
          %v1359 = vld [vmem:[#allocation2 + $0x2d8] sm:$0xff]
          %v1360 = vld [vmem:[#allocation2 + $0x2e0] sm:$0xff]
          %v1361 = vld [vmem:[#allocation2 + $0x2e8] sm:$0xff]
          %v1362 = vld [vmem:[#allocation2 + $0x2f0] sm:$0xff]
          %v1363 = vld [vmem:[#allocation2 + $0x2f8] sm:$0xff]
          %v1364 = vld [vmem:[#allocation8] sm:$0x7]
          %v1366 = vperm.slane %v1364, 0
          %v1367 = vperm.slane %v1364, 1
          %v1368 = vperm.slane %v1364, 2
          %v1372 = vmul.f32 %v1268, %v1366
          %v1373 = vmul.f32 %v1269, %v1367
          %v1374 = vmul.f32 %v1270, %v1368
          %v1375 = vmul.f32 %v1271, %v1366
          %v1376 = vmul.f32 %v1272, %v1367
          %v1377 = vmul.f32 %v1273, %v1368
          %v1378 = vmul.f32 %v1274, %v1366
          %v1379 = vmul.f32 %v1275, %v1367
          %v1380 = vmul.f32 %v1276, %v1368
          %v1381 = vmul.f32 %v1277, %v1366
          %v1382 = vmul.f32 %v1278, %v1367
          %v1383 = vmul.f32 %v1279, %v1368
          %v1384 = vmul.f32 %v1280, %v1366
          %v1385 = vmul.f32 %v1281, %v1367
          %v1386 = vmul.f32 %v1282, %v1368
          %v1387 = vmul.f32 %v1283, %v1366
          %v1388 = vmul.f32 %v1284, %v1367
          %v1389 = vmul.f32 %v1285, %v1368
          %v1390 = vmul.f32 %v1286, %v1366
          %v1391 = vmul.f32 %v1287, %v1367
          %v1392 = vmul.f32 %v1288, %v1368
          %v1393 = vmul.f32 %v1289, %v1366
          %v1394 = vmul.f32 %v1290, %v1367
          %v1395 = vmul.f32 %v1291, %v1368
          %v1396 = vmul.f32 %v1292, %v1366
          %v1397 = vmul.f32 %v1293, %v1367
          %v1398 = vmul.f32 %v1294, %v1368
          %v1399 = vmul.f32 %v1295, %v1366
          %v1400 = vmul.f32 %v1296, %v1367
          %v1401 = vmul.f32 %v1297, %v1368
          %v1402 = vmul.f32 %v1298, %v1366
          %v1403 = vmul.f32 %v1299, %v1367
          %v1404 = vmul.f32 %v1300, %v1368
          %v1405 = vmul.f32 %v1301, %v1366
          %v1406 = vmul.f32 %v1302, %v1367
          %v1407 = vmul.f32 %v1303, %v1368
          %v1408 = vmul.f32 %v1304, %v1366
          %v1409 = vmul.f32 %v1305, %v1367
          %v1410 = vmul.f32 %v1306, %v1368
          %v1411 = vmul.f32 %v1307, %v1366
          %v1412 = vmul.f32 %v1308, %v1367
          %v1413 = vmul.f32 %v1309, %v1368
          %v1414 = vmul.f32 %v1310, %v1366
          %v1415 = vmul.f32 %v1311, %v1367
          %v1416 = vmul.f32 %v1312, %v1368
          %v1417 = vmul.f32 %v1313, %v1366
          %v1418 = vmul.f32 %v1314, %v1367
          %v1419 = vmul.f32 %v1315, %v1368
          %v1420 = vmul.f32 %v1316, %v1366
          %v1421 = vmul.f32 %v1317, %v1367
          %v1422 = vmul.f32 %v1318, %v1368
          %v1423 = vmul.f32 %v1319, %v1366
          %v1424 = vmul.f32 %v1320, %v1367
          %v1425 = vmul.f32 %v1321, %v1368
          %v1426 = vmul.f32 %v1322, %v1366
          %v1427 = vmul.f32 %v1323, %v1367
          %v1428 = vmul.f32 %v1324, %v1368
          %v1429 = vmul.f32 %v1325, %v1366
          %v1430 = vmul.f32 %v1326, %v1367
          %v1431 = vmul.f32 %v1327, %v1368
          %v1432 = vmul.f32 %v1328, %v1366
          %v1433 = vmul.f32 %v1329, %v1367
          %v1434 = vmul.f32 %v1330, %v1368
          %v1435 = vmul.f32 %v1331, %v1366
          %v1436 = vmul.f32 %v1332, %v1367
          %v1437 = vmul.f32 %v1333, %v1368
          %v1438 = vmul.f32 %v1334, %v1366
          %v1439 = vmul.f32 %v1335, %v1367
          %v1440 = vmul.f32 %v1336, %v1368
          %v1441 = vmul.f32 %v1337, %v1366
          %v1442 = vmul.f32 %v1338, %v1367
          %v1443 = vmul.f32 %v1339, %v1368
          %v1444 = vmul.f32 %v1340, %v1366
          %v1445 = vmul.f32 %v1341, %v1367
          %v1446 = vmul.f32 %v1342, %v1368
          %v1447 = vmul.f32 %v1343, %v1366
          %v1448 = vmul.f32 %v1344, %v1367
          %v1449 = vmul.f32 %v1345, %v1368
          %v1450 = vmul.f32 %v1346, %v1366
          %v1451 = vmul.f32 %v1347, %v1367
          %v1452 = vmul.f32 %v1348, %v1368
          %v1453 = vmul.f32 %v1349, %v1366
          %v1454 = vmul.f32 %v1350, %v1367
          %v1455 = vmul.f32 %v1351, %v1368
          %v1456 = vmul.f32 %v1352, %v1366
          %v1457 = vmul.f32 %v1353, %v1367
          %v1458 = vmul.f32 %v1354, %v1368
          %v1459 = vmul.f32 %v1355, %v1366
          %v1460 = vmul.f32 %v1356, %v1367
          %v1461 = vmul.f32 %v1357, %v1368
          %v1462 = vmul.f32 %v1358, %v1366
          %v1463 = vmul.f32 %v1359, %v1367
          %v1464 = vmul.f32 %v1360, %v1368
          %v1465 = vmul.f32 %v1361, %v1366
          %v1466 = vmul.f32 %v1362, %v1367
          %v1467 = vmul.f32 %v1363, %v1368
          %v1468 = vld [vmem:[#allocation9] sm:$0x7]
          %v1470 = vperm.slane %v1468, 0
          %v1471 = vperm.slane %v1468, 1
          %v1472 = vperm.slane %v1468, 2
          %v1476 = vadd.f32 %v1372, %v1470
          %v1477 = vadd.f32 %v1373, %v1471
          %v1478 = vadd.f32 %v1374, %v1472
          %v1479 = vadd.f32 %v1375, %v1470
          %v1480 = vadd.f32 %v1376, %v1471
          %v1481 = vadd.f32 %v1377, %v1472
          %v1482 = vadd.f32 %v1378, %v1470
          %v1483 = vadd.f32 %v1379, %v1471
          %v1484 = vadd.f32 %v1380, %v1472
          %v1485 = vadd.f32 %v1381, %v1470
          %v1486 = vadd.f32 %v1382, %v1471
          %v1487 = vadd.f32 %v1383, %v1472
          %v1488 = vadd.f32 %v1384, %v1470
          %v1489 = vadd.f32 %v1385, %v1471
          %v1490 = vadd.f32 %v1386, %v1472
          %v1491 = vadd.f32 %v1387, %v1470
          %v1492 = vadd.f32 %v1388, %v1471
          %v1493 = vadd.f32 %v1389, %v1472
          %v1494 = vadd.f32 %v1390, %v1470
          %v1495 = vadd.f32 %v1391, %v1471
          %v1496 = vadd.f32 %v1392, %v1472
          %v1497 = vadd.f32 %v1393, %v1470
          %v1498 = vadd.f32 %v1394, %v1471
          %v1499 = vadd.f32 %v1395, %v1472
          %v1500 = vadd.f32 %v1396, %v1470
          %v1501 = vadd.f32 %v1397, %v1471
          %v1502 = vadd.f32 %v1398, %v1472
          %v1503 = vadd.f32 %v1399, %v1470
          %v1504 = vadd.f32 %v1400, %v1471
          %v1505 = vadd.f32 %v1401, %v1472
          %v1506 = vadd.f32 %v1402, %v1470
          %v1507 = vadd.f32 %v1403, %v1471
          %v1508 = vadd.f32 %v1404, %v1472
          %v1509 = vadd.f32 %v1405, %v1470
          %v1510 = vadd.f32 %v1406, %v1471
          %v1511 = vadd.f32 %v1407, %v1472
          %v1512 = vadd.f32 %v1408, %v1470
          %v1513 = vadd.f32 %v1409, %v1471
          %v1514 = vadd.f32 %v1410, %v1472
          %v1515 = vadd.f32 %v1411, %v1470
          %v1516 = vadd.f32 %v1412, %v1471
          %v1517 = vadd.f32 %v1413, %v1472
          %v1518 = vadd.f32 %v1414, %v1470
          %v1519 = vadd.f32 %v1415, %v1471
          %v1520 = vadd.f32 %v1416, %v1472
          %v1521 = vadd.f32 %v1417, %v1470
          %v1522 = vadd.f32 %v1418, %v1471
          %v1523 = vadd.f32 %v1419, %v1472
          %v1524 = vadd.f32 %v1420, %v1470
          %v1525 = vadd.f32 %v1421, %v1471
          %v1526 = vadd.f32 %v1422, %v1472
          %v1527 = vadd.f32 %v1423, %v1470
          %v1528 = vadd.f32 %v1424, %v1471
          %v1529 = vadd.f32 %v1425, %v1472
          %v1530 = vadd.f32 %v1426, %v1470
          %v1531 = vadd.f32 %v1427, %v1471
          %v1532 = vadd.f32 %v1428, %v1472
          %v1533 = vadd.f32 %v1429, %v1470
          %v1534 = vadd.f32 %v1430, %v1471
          %v1535 = vadd.f32 %v1431, %v1472
          %v1536 = vadd.f32 %v1432, %v1470
          %v1537 = vadd.f32 %v1433, %v1471
          %v1538 = vadd.f32 %v1434, %v1472
          %v1539 = vadd.f32 %v1435, %v1470
          %v1540 = vadd.f32 %v1436, %v1471
          %v1541 = vadd.f32 %v1437, %v1472
          %v1542 = vadd.f32 %v1438, %v1470
          %v1543 = vadd.f32 %v1439, %v1471
          %v1544 = vadd.f32 %v1440, %v1472
          %v1545 = vadd.f32 %v1441, %v1470
          %v1546 = vadd.f32 %v1442, %v1471
          %v1547 = vadd.f32 %v1443, %v1472
          %v1548 = vadd.f32 %v1444, %v1470
          %v1549 = vadd.f32 %v1445, %v1471
          %v1550 = vadd.f32 %v1446, %v1472
          %v1551 = vadd.f32 %v1447, %v1470
          %v1552 = vadd.f32 %v1448, %v1471
          %v1553 = vadd.f32 %v1449, %v1472
          %v1554 = vadd.f32 %v1450, %v1470
          %v1555 = vadd.f32 %v1451, %v1471
          %v1556 = vadd.f32 %v1452, %v1472
          %v1557 = vadd.f32 %v1453, %v1470
          %v1558 = vadd.f32 %v1454, %v1471
          %v1559 = vadd.f32 %v1455, %v1472
          %v1560 = vadd.f32 %v1456, %v1470
          %v1561 = vadd.f32 %v1457, %v1471
          %v1562 = vadd.f32 %v1458, %v1472
          %v1563 = vadd.f32 %v1459, %v1470
          %v1564 = vadd.f32 %v1460, %v1471
          %v1565 = vadd.f32 %v1461, %v1472
          %v1566 = vadd.f32 %v1462, %v1470
          %v1567 = vadd.f32 %v1463, %v1471
          %v1568 = vadd.f32 %v1464, %v1472
          %v1569 = vadd.f32 %v1465, %v1470
          %v1570 = vadd.f32 %v1466, %v1471
          %v1571 = vadd.f32 %v1467, %v1472
          %v1572 = vmax.f32 %v1476, 0.0
          %v1573 = vmax.f32 %v1477, 0.0
          %v1574 = vmax.f32 %v1478, 0.0
          %v1575 = vmax.f32 %v1479, 0.0
          %v1576 = vmax.f32 %v1480, 0.0
          %v1577 = vmax.f32 %v1481, 0.0
          %v1578 = vmax.f32 %v1482, 0.0
          %v1579 = vmax.f32 %v1483, 0.0
          %v1580 = vmax.f32 %v1484, 0.0
          %v1581 = vmax.f32 %v1485, 0.0
          %v1582 = vmax.f32 %v1486, 0.0
          %v1583 = vmax.f32 %v1487, 0.0
          %v1584 = vmax.f32 %v1488, 0.0
          %v1585 = vmax.f32 %v1489, 0.0
          %v1586 = vmax.f32 %v1490, 0.0
          %v1587 = vmax.f32 %v1491, 0.0
          %v1588 = vmax.f32 %v1492, 0.0
          %v1589 = vmax.f32 %v1493, 0.0
          %v1590 = vmax.f32 %v1494, 0.0
          %v1591 = vmax.f32 %v1495, 0.0
          %v1592 = vmax.f32 %v1496, 0.0
          %v1593 = vmax.f32 %v1497, 0.0
          %v1594 = vmax.f32 %v1498, 0.0
          %v1595 = vmax.f32 %v1499, 0.0
          %v1596 = vmax.f32 %v1500, 0.0
          %v1597 = vmax.f32 %v1501, 0.0
          %v1598 = vmax.f32 %v1502, 0.0
          %v1599 = vmax.f32 %v1503, 0.0
          %v1600 = vmax.f32 %v1504, 0.0
          %v1601 = vmax.f32 %v1505, 0.0
          %v1602 = vmax.f32 %v1506, 0.0
          %v1603 = vmax.f32 %v1507, 0.0
          %v1604 = vmax.f32 %v1508, 0.0
          %v1605 = vmax.f32 %v1509, 0.0
          %v1606 = vmax.f32 %v1510, 0.0
          %v1607 = vmax.f32 %v1511, 0.0
          %v1608 = vmax.f32 %v1512, 0.0
          %v1609 = vmax.f32 %v1513, 0.0
          %v1610 = vmax.f32 %v1514, 0.0
          %v1611 = vmax.f32 %v1515, 0.0
          %v1612 = vmax.f32 %v1516, 0.0
          %v1613 = vmax.f32 %v1517, 0.0
          %v1614 = vmax.f32 %v1518, 0.0
          %v1615 = vmax.f32 %v1519, 0.0
          %v1616 = vmax.f32 %v1520, 0.0
          %v1617 = vmax.f32 %v1521, 0.0
          %v1618 = vmax.f32 %v1522, 0.0
          %v1619 = vmax.f32 %v1523, 0.0
          %v1620 = vmax.f32 %v1524, 0.0
          %v1621 = vmax.f32 %v1525, 0.0
          %v1622 = vmax.f32 %v1526, 0.0
          %v1623 = vmax.f32 %v1527, 0.0
          %v1624 = vmax.f32 %v1528, 0.0
          %v1625 = vmax.f32 %v1529, 0.0
          %v1626 = vmax.f32 %v1530, 0.0
          %v1627 = vmax.f32 %v1531, 0.0
          %v1628 = vmax.f32 %v1532, 0.0
          %v1629 = vmax.f32 %v1533, 0.0
          %v1630 = vmax.f32 %v1534, 0.0
          %v1631 = vmax.f32 %v1535, 0.0
          %v1632 = vmax.f32 %v1536, 0.0
          %v1633 = vmax.f32 %v1537, 0.0
          %v1634 = vmax.f32 %v1538, 0.0
          %v1635 = vmax.f32 %v1539, 0.0
          %v1636 = vmax.f32 %v1540, 0.0
          %v1637 = vmax.f32 %v1541, 0.0
          %v1638 = vmax.f32 %v1542, 0.0
          %v1639 = vmax.f32 %v1543, 0.0
          %v1640 = vmax.f32 %v1544, 0.0
          %v1641 = vmax.f32 %v1545, 0.0
          %v1642 = vmax.f32 %v1546, 0.0
          %v1643 = vmax.f32 %v1547, 0.0
          %v1644 = vmax.f32 %v1548, 0.0
          %v1645 = vmax.f32 %v1549, 0.0
          %v1646 = vmax.f32 %v1550, 0.0
          %v1647 = vmax.f32 %v1551, 0.0
          %v1648 = vmax.f32 %v1552, 0.0
          %v1649 = vmax.f32 %v1553, 0.0
          %v1650 = vmax.f32 %v1554, 0.0
          %v1651 = vmax.f32 %v1555, 0.0
          %v1652 = vmax.f32 %v1556, 0.0
          %v1653 = vmax.f32 %v1557, 0.0
          %v1654 = vmax.f32 %v1558, 0.0
          %v1655 = vmax.f32 %v1559, 0.0
          %v1656 = vmax.f32 %v1560, 0.0
          %v1657 = vmax.f32 %v1561, 0.0
          %v1658 = vmax.f32 %v1562, 0.0
          %v1659 = vmax.f32 %v1563, 0.0
          %v1660 = vmax.f32 %v1564, 0.0
          %v1661 = vmax.f32 %v1565, 0.0
          %v1662 = vmax.f32 %v1566, 0.0
          %v1663 = vmax.f32 %v1567, 0.0
          %v1664 = vmax.f32 %v1568, 0.0
          %v1665 = vmax.f32 %v1569, 0.0
          %v1666 = vmax.f32 %v1570, 0.0
          %v1667 = vmax.f32 %v1571, 0.0
          %v1668 = vpack.c.bf16 %v1573, %v1572
          %v1669 = vpack.c.bf16 %v1574, %v1574
          %v1670 = vpack.c.bf16 %v1576, %v1575
          %v1671 = vpack.c.bf16 %v1577, %v1577
          %v1672 = vpack.c.bf16 %v1579, %v1578
          %v1673 = vpack.c.bf16 %v1580, %v1580
          %v1674 = vpack.c.bf16 %v1582, %v1581
          %v1675 = vpack.c.bf16 %v1583, %v1583
          %v1676 = vpack.c.bf16 %v1585, %v1584
          %v1677 = vpack.c.bf16 %v1586, %v1586
          %v1678 = vpack.c.bf16 %v1588, %v1587
          %v1679 = vpack.c.bf16 %v1589, %v1589
          %v1680 = vpack.c.bf16 %v1591, %v1590
          %v1681 = vpack.c.bf16 %v1592, %v1592
          %v1682 = vpack.c.bf16 %v1594, %v1593
          %v1683 = vpack.c.bf16 %v1595, %v1595
          %v1684 = vpack.c.bf16 %v1597, %v1596
          %v1685 = vpack.c.bf16 %v1598, %v1598
          %v1686 = vpack.c.bf16 %v1600, %v1599
          %v1687 = vpack.c.bf16 %v1601, %v1601
          %v1688 = vpack.c.bf16 %v1603, %v1602
          %v1689 = vpack.c.bf16 %v1604, %v1604
          %v1690 = vpack.c.bf16 %v1606, %v1605
          %v1691 = vpack.c.bf16 %v1607, %v1607
          %v1692 = vpack.c.bf16 %v1609, %v1608
          %v1693 = vpack.c.bf16 %v1610, %v1610
          %v1694 = vpack.c.bf16 %v1612, %v1611
          %v1695 = vpack.c.bf16 %v1613, %v1613
          %v1696 = vpack.c.bf16 %v1615, %v1614
          %v1697 = vpack.c.bf16 %v1616, %v1616
          %v1698 = vpack.c.bf16 %v1618, %v1617
          %v1699 = vpack.c.bf16 %v1619, %v1619
          %v1700 = vpack.c.bf16 %v1621, %v1620
          %v1701 = vpack.c.bf16 %v1622, %v1622
          %v1702 = vpack.c.bf16 %v1624, %v1623
          %v1703 = vpack.c.bf16 %v1625, %v1625
          %v1704 = vpack.c.bf16 %v1627, %v1626
          %v1705 = vpack.c.bf16 %v1628, %v1628
          %v1706 = vpack.c.bf16 %v1630, %v1629
          %v1707 = vpack.c.bf16 %v1631, %v1631
          %v1708 = vpack.c.bf16 %v1633, %v1632
          %v1709 = vpack.c.bf16 %v1634, %v1634
          %v1710 = vpack.c.bf16 %v1636, %v1635
          %v1711 = vpack.c.bf16 %v1637, %v1637
          %v1712 = vpack.c.bf16 %v1639, %v1638
          %v1713 = vpack.c.bf16 %v1640, %v1640
          %v1714 = vpack.c.bf16 %v1642, %v1641
          %v1715 = vpack.c.bf16 %v1643, %v1643
          %v1716 = vpack.c.bf16 %v1645, %v1644
          %v1717 = vpack.c.bf16 %v1646, %v1646
          %v1718 = vpack.c.bf16 %v1648, %v1647
          %v1719 = vpack.c.bf16 %v1649, %v1649
          %v1720 = vpack.c.bf16 %v1651, %v1650
          %v1721 = vpack.c.bf16 %v1652, %v1652
          %v1722 = vpack.c.bf16 %v1654, %v1653
          %v1723 = vpack.c.bf16 %v1655, %v1655
          %v1724 = vpack.c.bf16 %v1657, %v1656
          %v1725 = vpack.c.bf16 %v1658, %v1658
          %v1726 = vpack.c.bf16 %v1660, %v1659
          %v1727 = vpack.c.bf16 %v1661, %v1661
          %v1728 = vpack.c.bf16 %v1663, %v1662
          %v1729 = vpack.c.bf16 %v1664, %v1664
          %v1730 = vpack.c.bf16 %v1666, %v1665
          %v1731 = vpack.c.bf16 %v1667, %v1667
          %1732 = vst [vmem:[%s314] sm:$0xff] %v1668
          %1733 = vst [vmem:[%s314 + $0x8] sm:$0xf] %v1669
          %1734 = vst [vmem:[%s314 + $0xc] sm:$0xff] %v1670
          %1735 = vst [vmem:[%s314 + $0x14] sm:$0xf] %v1671
          %1736 = vst [vmem:[%s314 + $0x18] sm:$0xff] %v1672
          %1737 = vst [vmem:[%s314 + $0x20] sm:$0xf] %v1673
          %1738 = vst [vmem:[%s314 + $0x24] sm:$0xff] %v1674
          %1739 = vst [vmem:[%s314 + $0x2c] sm:$0xf] %v1675
          %1740 = vst [vmem:[%s314 + $0x30] sm:$0xff] %v1676
          %1741 = vst [vmem:[%s314 + $0x38] sm:$0xf] %v1677
          %1742 = vst [vmem:[%s314 + $0x3c] sm:$0xff] %v1678
          %1743 = vst [vmem:[%s314 + $0x44] sm:$0xf] %v1679
          %1744 = vst [vmem:[%s314 + $0x48] sm:$0xff] %v1680
          %1745 = vst [vmem:[%s314 + $0x50] sm:$0xf] %v1681
          %1746 = vst [vmem:[%s314 + $0x54] sm:$0xff] %v1682
          %1747 = vst [vmem:[%s314 + $0x5c] sm:$0xf] %v1683
          %1748 = vst [vmem:[%s314 + $0x60] sm:$0xff] %v1684
          %1749 = vst [vmem:[%s314 + $0x68] sm:$0xf] %v1685
          %1750 = vst [vmem:[%s314 + $0x6c] sm:$0xff] %v1686
          %1751 = vst [vmem:[%s314 + $0x74] sm:$0xf] %v1687
          %1752 = vst [vmem:[%s314 + $0x78] sm:$0xff] %v1688
          %1753 = vst [vmem:[%s314 + $0x80] sm:$0xf] %v1689
          %1754 = vst [vmem:[%s314 + $0x84] sm:$0xff] %v1690
          %1755 = vst [vmem:[%s314 + $0x8c] sm:$0xf] %v1691
          %1756 = vst [vmem:[%s314 + $0x90] sm:$0xff] %v1692
          %1757 = vst [vmem:[%s314 + $0x98] sm:$0xf] %v1693
          %1758 = vst [vmem:[%s314 + $0x9c] sm:$0xff] %v1694
          %1759 = vst [vmem:[%s314 + $0xa4] sm:$0xf] %v1695
          %1760 = vst [vmem:[%s314 + $0xa8] sm:$0xff] %v1696
          %1761 = vst [vmem:[%s314 + $0xb0] sm:$0xf] %v1697
          %1762 = vst [vmem:[%s314 + $0xb4] sm:$0xff] %v1698
          %1763 = vst [vmem:[%s314 + $0xbc] sm:$0xf] %v1699
          %1764 = vst [vmem:[%s314 + $0xc0] sm:$0xff] %v1700
          %1765 = vst [vmem:[%s314 + $0xc8] sm:$0xf] %v1701
          %1766 = vst [vmem:[%s314 + $0xcc] sm:$0xff] %v1702
          %1767 = vst [vmem:[%s314 + $0xd4] sm:$0xf] %v1703
          %1768 = vst [vmem:[%s314 + $0xd8] sm:$0xff] %v1704
          %1769 = vst [vmem:[%s314 + $0xe0] sm:$0xf] %v1705
          %1770 = vst [vmem:[%s314 + $0xe4] sm:$0xff] %v1706
          %1771 = vst [vmem:[%s314 + $0xec] sm:$0xf] %v1707
          %1772 = vst [vmem:[%s314 + $0xf0] sm:$0xff] %v1708
          %1773 = vst [vmem:[%s314 + $0xf8] sm:$0xf] %v1709
          %1774 = vst [vmem:[%s314 + $0xfc] sm:$0xff] %v1710
          %1775 = vst [vmem:[%s314 + $0x104] sm:$0xf] %v1711
          %1776 = vst [vmem:[%s314 + $0x108] sm:$0xff] %v1712
          %1777 = vst [vmem:[%s314 + $0x110] sm:$0xf] %v1713
          %1778 = vst [vmem:[%s314 + $0x114] sm:$0xff] %v1714
          %1779 = vst [vmem:[%s314 + $0x11c] sm:$0xf] %v1715
          %1780 = vst [vmem:[%s314 + $0x120] sm:$0xff] %v1716
          %1781 = vst [vmem:[%s314 + $0x128] sm:$0xf] %v1717
          %1782 = vst [vmem:[%s314 + $0x12c] sm:$0xff] %v1718
          %1783 = vst [vmem:[%s314 + $0x134] sm:$0xf] %v1719
          %1784 = vst [vmem:[%s314 + $0x138] sm:$0xff] %v1720
          %1785 = vst [vmem:[%s314 + $0x140] sm:$0xf] %v1721
          %1786 = vst [vmem:[%s314 + $0x144] sm:$0xff] %v1722
          %1787 = vst [vmem:[%s314 + $0x14c] sm:$0xf] %v1723
          %1788 = vst [vmem:[%s314 + $0x150] sm:$0xff] %v1724
          %1789 = vst [vmem:[%s314 + $0x158] sm:$0xf] %v1725
          %1790 = vst [vmem:[%s314 + $0x15c] sm:$0xff] %v1726
          %1791 = vst [vmem:[%s314 + $0x164] sm:$0xf] %v1727
          %1792 = vst [vmem:[%s314 + $0x168] sm:$0xff] %v1728
          %1793 = vst [vmem:[%s314 + $0x170] sm:$0xf] %v1729
          %1794 = vst [vmem:[%s314 + $0x174] sm:$0xff] %v1730
          %1795 = vst [vmem:[%s314 + $0x17c] sm:$0xf] %v1731
        $region60: #{tpu_custom_call.1} parent=35 // pred_fallthru
          _
        %s1796 = sand.u32 %s160, 1
        %s1797 = scalar_lea.sflag [#allocation5], %s1796
        %s1798 = sand.u32 %s160, 1
        %s1799 = smul.addr %s1798, 384
        %s1800 = scalar_lea.vmem [#allocation11], %s1799
        // Predicated region
        $region61: #{tpu_custom_call.1} parent=35 // pred_check
          %p1801 = pneg %p170
        $region62: #{tpu_custom_call.1} parent=35 // pred_check_branch
          %1803 = sbr.rel (%p1801) target = $region64
        $region63: #{tpu_custom_call.1} parent=35 // pred_region
          %s1804 = smul.u32 32, %s28
          %s1805 = smul.u32 3, %s29
          %1807 = vsyncadd %s1797, 0
          %s1808 = smul.addr %s1804, 3
          %s1809 = sadd.s32 %s1805, %s1808
          %s1810 = smul.addr %s1809, 4
          %s1811 = scalar_lea.hbm %s4, %s1810
          %s1812 = sshll.u32 %s1800, 4
          %s1813 = int_to_ptr.vmem [resolvable:$true] %s1812
          %s1814 = sshll.u32 %s1811, 4
          %s1815 = int_to_ptr.hbm [resolvable:$true] %s1814
          %1820 = dma.vmem_to_hbm [thread:$0]  %s1813, 6144, %s1815, %s1797, 192, 192, 12
        $region64: #{tpu_custom_call.1} parent=35 // pred_fallthru
          _
      $region36: #{tpu_custom_call.1} parent=5 // pred_fallthru
        _
      %p1821 = scmp.le.s32.totalorder 2, %s18
      // Predicated region
      $region65: #{tpu_custom_call.1} parent=5 // pred_check
        %p1822 = pneg %p1821
      $region66: #{tpu_custom_call.1} parent=5 // pred_check_branch
        %1824 = sbr.rel (%p1822) target = $region68
      $region67: #{tpu_custom_call.1} parent=5 // pred_region
        %s1825 = ssub.s32 %s18, 2
        // Predicated region
        $region69: #{tpu_custom_call.1} parent=67 // pred_check
          %p1826 = pneg %p176
        $region70: #{tpu_custom_call.1} parent=67 // pred_check_branch
          %1828 = sbr.rel (%p1826) target = $region72
        $region71: #{tpu_custom_call.1} parent=67 // pred_region
          %s1829 = sand.u32 %s161, 1
          %s1830 = scalar_lea.sflag [#allocation5], %s1829
          %s1831 = sand.u32 %s161, 1
          %s1832 = smul.addr %s1831, 384
          %s1833 = scalar_lea.vmem [#allocation11], %s1832
          %1835 = dma.done %s1830, 6144
        $region72: #{tpu_custom_call.1} parent=67 // pred_fallthru
          _
      $region68: #{tpu_custom_call.1} parent=5 // pred_fallthru
        _
    $region6: #{tpu_custom_call.1} parent=1 // loop_footer
      %s22 = sadd.s32 1, %s18
    $region7: #{tpu_custom_call.1} parent=1 // loop_footer_branch
      %17 = sbr.rel target = $region3
    $region8: #{tpu_custom_call.1} parent=1 // loop_exit
      _
    %1836 = vsyncpa [#allocation4], 1
    %s1837 = scalar_lea.sflag [#allocation4], 1
    %1838 = vsyncpa %s1837, 1
    %1839 = vsyncpa [#allocation7], 1
    %1840 = vsyncpa [#allocation10], 1
    %1841 = vsyncpa [#allocation5], 1
    %s1842 = scalar_lea.sflag [#allocation5], 1
    %1843 = vsyncpa %s1842, 1

</llo_original>
